<compile_context>
chip_gen: v6e
topology: v6e:2x2x1
jax: 0.10.0
libtpu: 0.0.40
codegen_flags: <defaults>
</compile_context>

<pallas_src>
import jax
import jax.numpy as jnp
from jax.experimental import pallas as pl
from jax.experimental.pallas import tpu as pltpu


_WEIGHT_NAMES = ("w1p", "b1p", "wrz", "brz", "win", "bin", "whn", "bhn",
                 "w2", "b2", "w3p", "b3p")


def rnn_learner_kernel(x_ref, h0_ref,
                       w1_ref, b1_ref,      # layer-1 (f32, used on the VPU)
                       wrz_ref, brz_ref,    # fused GRU r/z gates (bf16 weights, f32 bias)
                       win_ref, bin_ref,    # GRU n-gate, input part
                       whn_ref, bhn_ref,    # GRU n-gate, hidden part
                       w2_ref, b2_ref,      # head layer 1
                       w3_ref, b3_ref,      # head layer 2 (output lanes padded to 128)
                       out_ref, h_ref,      # outputs: padded prediction, carried hidden state
                       xh_ref):             # VMEM scratch: [l1 | h] in bf16
    t = pl.program_id(0)
    B = h_ref.shape[0]
    H = h_ref.shape[-1]
    L1P = w1_ref.shape[-1]

    # Load the initial hidden state into the resident output block once; afterwards the block
    # (constant index_map on an "arbitrary" grid axis) carries h across time steps and is
    # written back to HBM a single time at the end.
    @pl.when(t == 0)
    def _():
        h_ref[...] = h0_ref[...]

    x = x_ref[0]          # (B, y_dim) f32  -- obs for this time step
    h = h_ref[...]        # (B, H)     f32  -- carried hidden state

    # ---- layer 1: Linear + ReLU.  K = y_dim (=4) would waste a full MXU pass, so compute it
    # as y_dim VPU multiply-adds.  Padded columns (L1 -> L1P) are exactly 0.
    w1 = w1_ref[...]
    l1 = jnp.broadcast_to(b1_ref[...], (B, L1P))
    for k in range(x.shape[1]):                       # static, unrolled
        l1 = l1 + x[:, k:k + 1] * w1[k:k + 1, :]
    l1 = jnp.maximum(l1, 0.0)                         # (B, L1P) f32

    # ---- single GRU step (PyTorch gate order r, z, n); r/z fused into ONE MXU dot over [l1|h].
    xh_ref[:, :L1P] = l1.astype(jnp.bfloat16)         # lane-aligned stores (L1P % 128 == 0)
    xh_ref[:, L1P:] = h.astype(jnp.bfloat16)
    rz = jnp.dot(xh_ref[...], wrz_ref[...],
                 preferred_element_type=jnp.float32) + brz_ref[...]
    r = jax.nn.sigmoid(rz[:, :H])
    z = jax.nn.sigmoid(rz[:, H:])
    gx_n = jnp.dot(l1.astype(jnp.bfloat16), win_ref[...],
                   preferred_element_type=jnp.float32) + bin_ref[...]
    gh_n = jnp.dot(h.astype(jnp.bfloat16), whn_ref[...],
                   preferred_element_type=jnp.float32) + bhn_ref[...]
    n = jnp.tanh(gx_n + r * gh_n)
    h_new = (1.0 - z) * n + z * h
    h_ref[...] = h_new

    # ---- head: Linear + ReLU + Linear.  Output padded to 128 lanes -> dense (unmasked) stores.
    a = jnp.dot(h_new.astype(jnp.bfloat16), w2_ref[...],
                preferred_element_type=jnp.float32) + b2_ref[...]
    a = jnp.maximum(a, 0.0)
    out_ref[0] = jnp.dot(a.astype(jnp.bfloat16), w3_ref[...],
                         preferred_element_type=jnp.float32) + b3_ref[...]


def learner_vanilla_rnn_forward(obs, hn, kp):
    """Learner_Vanilla_RNN forward.

    obs: (T, B, y_dim, 1)  -- T consecutive forward() calls -- or (B, y_dim, 1) for one call.
    hn:  (1, B, gru_hidden) initial hidden state.
    kp:  packed parameters from pack_params().
    Returns (x_predict, hn_new) with x_predict (T, B, x_dim) (or (B, x_dim)) and
    hn_new (1, B, gru_hidden).
    """
    single = obs.ndim == 3
    obs_seq = obs[None] if single else obs
    T, B, y_dim = obs_seq.shape[0], obs_seq.shape[1], obs_seq.shape[2]
    H = hn.shape[-1]
    x_dim = kp["x_dim"]
    L1P = kp["w1p"].shape[-1]
    L2 = kp["w2"].shape[-1]
    NPAD = kp["w3p"].shape[-1]

    # permute(2,0,1).squeeze() on a trailing singleton dim is just a (free) reshape.
    x3d = obs_seq.reshape(T, B, y_dim)
    h2d = hn.reshape(B, H)

    def w_spec(arr):
        return pl.BlockSpec(arr.shape, lambda t: (0, 0))   # resident: DMA'd once, never again

    grid_spec = pltpu.PrefetchScalarGridSpec(
        num_scalar_prefetch=0,
        grid=(T,),
        in_specs=[pl.BlockSpec((1, B, y_dim), lambda t: (t, 0, 0)),   # obs for step t
                  pl.BlockSpec((B, H), lambda t: (0, 0))]             # h0 (resident)
                 + [w_spec(kp[nm]) for nm in _WEIGHT_NAMES],
        out_specs=(pl.BlockSpec((1, B, NPAD), lambda t: (t, 0, 0)),   # per-step prediction
                   pl.BlockSpec((B, H), lambda t: (0, 0))),           # carried hidden state
        scratch_shapes=[pltpu.VMEM((B, L1P + H), jnp.bfloat16)],      # [l1 | h] operand
    )

    flops = 2 * T * B * (y_dim * L1P + (L1P + H) * 2 * H + L1P * H
                         + H * H + H * L2 + L2 * NPAD)
    transcendentals = 3 * T * B * H
    weight_bytes = sum(int(kp[nm].size) * kp[nm].dtype.itemsize for nm in _WEIGHT_NAMES)
    bytes_accessed = int(weight_bytes) + 4 * (T * B * y_dim + T * B * NPAD + 2 * B * H)

    out_pad, h_new = pl.pallas_call(
        rnn_learner_kernel,
        out_shape=(jax.ShapeDtypeStruct((T, B, NPAD), jnp.float32),
                   jax.ShapeDtypeStruct((B, H), jnp.float32)),
        grid_spec=grid_spec,
        input_output_aliases={1: 1},                     # hidden state updated in place
        cost_estimate=pl.CostEstimate(flops=flops,
                                      transcendentals=transcendentals,
                                      bytes_accessed=bytes_accessed),
        compiler_params=pltpu.CompilerParams(
            dimension_semantics=("arbitrary",),          # recurrent (sequential) time axis
            vmem_limit_bytes=32 * 1024 * 1024),
    )(x3d, h2d, *(kp[nm] for nm in _WEIGHT_NAMES))

    x_predict = out_pad[:, :, :x_dim]
    if single:
        x_predict = x_predict[0]
    return x_predict, h_new.reshape(1, B, H)


def init_params(key, x_dim, y_dim):
    """PyTorch-equivalent init; weights stored as (in_features, out_features)."""
    l1_hidden = (x_dim + y_dim) * 10 * 4
    gru_hidden = 4 * (x_dim ** 2 + y_dim ** 2)
    l2_hidden = x_dim * y_dim * 4
    ks = jax.random.split(key, 10)

    def u(k, shape, fan_in):
        bound = 1.0 / float(fan_in) ** 0.5
        return jax.random.uniform(k, shape, jnp.float32, -bound, bound)

    return {
        "w1": u(ks[0], (y_dim, l1_hidden), y_dim),
        "b1": u(ks[1], (1, l1_hidden), y_dim),
        "wih": u(ks[2], (l1_hidden, 3 * gru_hidden), gru_hidden),
        "bih": u(ks[3], (1, 3 * gru_hidden), gru_hidden),
        "whh": u(ks[4], (gru_hidden, 3 * gru_hidden), gru_hidden),
        "bhh": u(ks[5], (1, 3 * gru_hidden), gru_hidden),
        "w2": u(ks[6], (gru_hidden, l2_hidden), gru_hidden),
        "b2": u(ks[7], (1, l2_hidden), gru_hidden),
        "w3": u(ks[8], (l2_hidden, x_dim), l2_hidden),
        "b3": u(ks[9], (1, x_dim), l2_hidden),
    }


def pack_params(p, x_dim):
    """Repack parameters for the kernel: layer-1 width padded to a multiple of 128 lanes
    (padded columns exactly 0), GRU r/z weights of W_ih/W_hh stacked into one matrix with
    the biases pre-summed, large matmul weights cast to bf16 (f32 accumulation in-kernel),
    and the final projection padded to 128 output lanes."""
    L1 = p["w1"].shape[1]
    H = p["whh"].shape[0]
    L1P = ((L1 + 127) // 128) * 128
    NPAD = 128
    f32, bf16 = jnp.float32, jnp.bfloat16

    pad_cols = lambda a, n: jnp.pad(a, ((0, 0), (0, n - a.shape[1])))
    pad_rows = lambda a, n: jnp.pad(a, ((0, n - a.shape[0]), (0, 0)))

    wrz = jnp.concatenate([pad_rows(p["wih"][:, :2 * H], L1P),
                           p["whh"][:, :2 * H]], axis=0)            # (L1P + H, 2H)

    return {
        "x_dim": x_dim,
        "w1p": pad_cols(p["w1"], L1P).astype(f32),
        "b1p": pad_cols(p["b1"], L1P).astype(f32),
        "wrz": wrz.astype(bf16),
        "brz": (p["bih"][:, :2 * H] + p["bhh"][:, :2 * H]).astype(f32),
        "win": pad_rows(p["wih"][:, 2 * H:], L1P).astype(bf16),
        "bin": p["bih"][:, 2 * H:].astype(f32),
        "whn": p["whh"][:, 2 * H:].astype(bf16),
        "bhn": p["bhh"][:, 2 * H:].astype(f32),
        "w2": p["w2"].astype(bf16),
        "b2": p["b2"].astype(f32),
        "w3p": pad_cols(p["w3"], NPAD).astype(bf16),
        "b3p": pad_cols(p["b3"], NPAD).astype(f32),
    }


def reference_forward_seq(obs_seq, hn, p):
    """Original-module math (Linear+ReLU -> GRU step with gate order r,z,n and
    n = tanh(gx_n + r*gh_n) -> Linear+ReLU+Linear) applied T times with the hidden state
    carried, using the same precision policy as the kernel (bf16 dot inputs, f32
    accumulation and f32 gate math)."""
    bf = lambda a: a.astype(jnp.bfloat16)
    dot = lambda a, w: jnp.dot(bf(a), bf(w), preferred_element_type=jnp.float32)
    T, B = obs_seq.shape[0], obs_seq.shape[1]
    H = hn.shape[-1]
    h = hn.reshape(B, H)
    outs = []
    for t in range(T):
        x = obs_seq[t, :, :, 0]                        # == permute(2,0,1).squeeze()
        l1 = jnp.maximum(x @ p["w1"] + p["b1"], 0.0)
        gx = dot(l1, p["wih"]) + p["bih"]
        gh = dot(h, p["whh"]) + p["bhh"]
        r = jax.nn.sigmoid(gx[:, :H] + gh[:, :H])
        z = jax.nn.sigmoid(gx[:, H:2 * H] + gh[:, H:2 * H])
        n = jnp.tanh(gx[:, 2 * H:] + r * gh[:, 2 * H:])
        h = (1.0 - z) * n + z * h
        a = jnp.maximum(dot(h, p["w2"]) + p["b2"], 0.0)
        outs.append(dot(a, p["w3"]) + p["b3"])
    return jnp.stack(outs, axis=0), h


if __name__ == "__main__":
    x_dim, y_dim = 4, 4        # -> l1_hidden=320, gru_hidden=128, l2_hidden=64
    batch = 8                  # args.batch_size
    T = 4                      # consecutive forward() calls fused into one launch

    key = jax.random.PRNGKey(0)
    kparam, kobs, kh = jax.random.split(key, 3)
    params = init_params(kparam, x_dim, y_dim)
    packed = pack_params(params, x_dim)

    gru_hidden = 4 * (x_dim ** 2 + y_dim ** 2)
    obs_seq = jax.random.normal(kobs, (T, batch, y_dim, 1), jnp.float32)
    hn_init = jax.random.normal(kh, (1, batch, gru_hidden), jnp.float32)

    # Compute the reference first: the pallas_call aliases (donates) the hidden-state input.
    ref_out, ref_h = reference_forward_seq(obs_seq, hn_init, params)
    ref_out = jax.block_until_ready(ref_out)

    x_predict, hn_new = learner_vanilla_rnn_forward(obs_seq, hn_init, packed)
    x_predict = jax.block_until_ready(x_predict)
    hn_new = jax.block_until_ready(hn_new)

    assert x_predict.shape == (T, batch, x_dim), x_predict.shape
    assert hn_new.shape == (1, batch, gru_hidden), hn_new.shape
    assert bool(jnp.allclose(x_predict, ref_out, atol=1e-2, rtol=1e-2)), \
        float(jnp.max(jnp.abs(x_predict - ref_out)))
    assert bool(jnp.allclose(hn_new[0], ref_h, atol=1e-2, rtol=1e-2)), \
        float(jnp.max(jnp.abs(hn_new[0] - ref_h)))

    print("KERNEL_OK")
</pallas_src>

<mosaic_0001>
module attributes {stable_mosaic.version = 11 : i64} {
  func.func @rnn_learner_kernel(%arg0: i32, %arg1: memref<1x8x4xf32, #tpu.memory_space<vmem>>, %arg2: memref<8x128xf32, #tpu.memory_space<vmem>>, %arg3: memref<4x384xf32, #tpu.memory_space<vmem>>, %arg4: memref<1x384xf32, #tpu.memory_space<vmem>>, %arg5: memref<512x256xbf16, #tpu.memory_space<vmem>>, %arg6: memref<1x256xf32, #tpu.memory_space<vmem>>, %arg7: memref<384x128xbf16, #tpu.memory_space<vmem>>, %arg8: memref<1x128xf32, #tpu.memory_space<vmem>>, %arg9: memref<128x128xbf16, #tpu.memory_space<vmem>>, %arg10: memref<1x128xf32, #tpu.memory_space<vmem>>, %arg11: memref<128x64xbf16, #tpu.memory_space<vmem>>, %arg12: memref<1x64xf32, #tpu.memory_space<vmem>>, %arg13: memref<64x128xbf16, #tpu.memory_space<vmem>>, %arg14: memref<1x128xf32, #tpu.memory_space<vmem>>, %arg15: memref<1x8x128xf32, #tpu.memory_space<vmem>>, %arg16: memref<8x128xf32, #tpu.memory_space<vmem>>, %arg17: memref<8x512xbf16, #tpu.memory_space<vmem>>) attributes {dimension_semantics = [#tpu.dimension_semantics<arbitrary>], iteration_bounds = array<i64: 4>, scalar_prefetch = 0 : i64, scratch_operands = 1 : i64, tpu.core_type = #tpu.core_type<tc>, window_params = [{transform_indices = @transform_0, window_bounds = array<i64: 1, 8, 4>}, {pipeline_mode = #tpu.pipeline_mode<synchronous>, transform_indices = @transform_1, window_bounds = array<i64: 8, 128>}, {pipeline_mode = #tpu.pipeline_mode<synchronous>, transform_indices = @transform_2, window_bounds = array<i64: 4, 384>}, {pipeline_mode = #tpu.pipeline_mode<synchronous>, transform_indices = @transform_3, window_bounds = array<i64: 1, 384>}, {pipeline_mode = #tpu.pipeline_mode<synchronous>, transform_indices = @transform_4, window_bounds = array<i64: 512, 256>}, {pipeline_mode = #tpu.pipeline_mode<synchronous>, transform_indices = @transform_5, window_bounds = array<i64: 1, 256>}, {pipeline_mode = #tpu.pipeline_mode<synchronous>, transform_indices = @transform_6, window_bounds = array<i64: 384, 128>}, {pipeline_mode = #tpu.pipeline_mode<synchronous>, transform_indices = @transform_7, window_bounds = array<i64: 1, 128>}, {pipeline_mode = #tpu.pipeline_mode<synchronous>, transform_indices = @transform_8, window_bounds = array<i64: 128, 128>}, {pipeline_mode = #tpu.pipeline_mode<synchronous>, transform_indices = @transform_9, window_bounds = array<i64: 1, 128>}, {pipeline_mode = #tpu.pipeline_mode<synchronous>, transform_indices = @transform_10, window_bounds = array<i64: 128, 64>}, {pipeline_mode = #tpu.pipeline_mode<synchronous>, transform_indices = @transform_11, window_bounds = array<i64: 1, 64>}, {pipeline_mode = #tpu.pipeline_mode<synchronous>, transform_indices = @transform_12, window_bounds = array<i64: 64, 128>}, {pipeline_mode = #tpu.pipeline_mode<synchronous>, transform_indices = @transform_13, window_bounds = array<i64: 1, 128>}, {transform_indices = @transform_14, window_bounds = array<i64: 1, 8, 128>}, {pipeline_mode = #tpu.pipeline_mode<synchronous>, transform_indices = @transform_15, window_bounds = array<i64: 8, 128>}]} {
    %c0_i32 = arith.constant 0 : i32
    %0 = arith.cmpi eq, %arg0, %c0_i32 : i32
    %1 = arith.extui %0 : i1 to i32
    %c0_i32_0 = arith.constant 0 : i32
    %2 = arith.cmpi ne, %1, %c0_i32_0 : i32
    scf.if %2 {
      %c0_48 = arith.constant 0 : index
      %c0_49 = arith.constant 0 : index
      %96 = vector.load %arg2[%c0_48, %c0_49] : memref<8x128xf32, #tpu.memory_space<vmem>>, vector<8x128xf32>
      %c0_50 = arith.constant 0 : index
      %c0_51 = arith.constant 0 : index
      %97 = vector.load %arg16[%c0_50, %c0_51] : memref<8x128xf32, #tpu.memory_space<vmem>>, vector<8x128xf32>
      tpu.vector_store %arg16[%c0_50, %c0_51], %96 {strides = array<i32>} : memref<8x128xf32, #tpu.memory_space<vmem>>, vector<8x128xf32>,
    } else {
    }
    %c0 = arith.constant 0 : index
    %c0_1 = arith.constant 0 : index
    %c0_2 = arith.constant 0 : index
    %3 = vector.load %arg1[%c0, %c0_1, %c0_2] : memref<1x8x4xf32, #tpu.memory_space<vmem>>, vector<1x8x4xf32>
    %4 = vector.shape_cast %3 : vector<1x8x4xf32> to vector<8x4xf32>
    %c0_3 = arith.constant 0 : index
    %c0_4 = arith.constant 0 : index
    %5 = vector.load %arg16[%c0_3, %c0_4] : memref<8x128xf32, #tpu.memory_space<vmem>>, vector<8x128xf32>
    %c0_5 = arith.constant 0 : index
    %c0_6 = arith.constant 0 : index
    %6 = vector.load %arg3[%c0_5, %c0_6] : memref<4x384xf32, #tpu.memory_space<vmem>>, vector<4x384xf32>
    %c0_7 = arith.constant 0 : index
    %c0_8 = arith.constant 0 : index
    %7 = vector.load %arg4[%c0_7, %c0_8] : memref<1x384xf32, #tpu.memory_space<vmem>>, vector<1x384xf32>
    %8 = vector.shape_cast %7 : vector<1x384xf32> to vector<1x384xf32>
    %9 = vector.broadcast %8 : vector<1x384xf32> to vector<8x384xf32>
    %10 = vector.extract_strided_slice %4 {offsets = [0, 0], sizes = [8, 1], strides = [1, 1]} : vector<8x4xf32> to vector<8x1xf32>
    %11 = vector.extract_strided_slice %6 {offsets = [0, 0], sizes = [1, 384], strides = [1, 1]} : vector<4x384xf32> to vector<1x384xf32>
    %12 = vector.broadcast %10 : vector<8x1xf32> to vector<8x384xf32>
    %13 = vector.broadcast %11 : vector<1x384xf32> to vector<8x384xf32>
    %14 = arith.mulf %12, %13 : vector<8x384xf32>
    %15 = arith.addf %9, %14 : vector<8x384xf32>
    %16 = vector.extract_strided_slice %4 {offsets = [0, 1], sizes = [8, 1], strides = [1, 1]} : vector<8x4xf32> to vector<8x1xf32>
    %17 = vector.extract_strided_slice %6 {offsets = [1, 0], sizes = [1, 384], strides = [1, 1]} : vector<4x384xf32> to vector<1x384xf32>
    %18 = vector.broadcast %16 : vector<8x1xf32> to vector<8x384xf32>
    %19 = vector.broadcast %17 : vector<1x384xf32> to vector<8x384xf32>
    %20 = arith.mulf %18, %19 : vector<8x384xf32>
    %21 = arith.addf %15, %20 : vector<8x384xf32>
    %22 = vector.extract_strided_slice %4 {offsets = [0, 2], sizes = [8, 1], strides = [1, 1]} : vector<8x4xf32> to vector<8x1xf32>
    %23 = vector.extract_strided_slice %6 {offsets = [2, 0], sizes = [1, 384], strides = [1, 1]} : vector<4x384xf32> to vector<1x384xf32>
    %24 = vector.broadcast %22 : vector<8x1xf32> to vector<8x384xf32>
    %25 = vector.broadcast %23 : vector<1x384xf32> to vector<8x384xf32>
    %26 = arith.mulf %24, %25 : vector<8x384xf32>
    %27 = arith.addf %21, %26 : vector<8x384xf32>
    %28 = vector.extract_strided_slice %4 {offsets = [0, 3], sizes = [8, 1], strides = [1, 1]} : vector<8x4xf32> to vector<8x1xf32>
    %29 = vector.extract_strided_slice %6 {offsets = [3, 0], sizes = [1, 384], strides = [1, 1]} : vector<4x384xf32> to vector<1x384xf32>
    %30 = vector.broadcast %28 : vector<8x1xf32> to vector<8x384xf32>
    %31 = vector.broadcast %29 : vector<1x384xf32> to vector<8x384xf32>
    %32 = arith.mulf %30, %31 : vector<8x384xf32>
    %33 = arith.addf %27, %32 : vector<8x384xf32>
    %cst = arith.constant 0.000000e+00 : f32
    %34 = vector.broadcast %cst : f32 to vector<8x384xf32>
    %35 = arith.maximumf %33, %34 : vector<8x384xf32>
    %36 = arith.truncf %35 : vector<8x384xf32> to vector<8x384xbf16>
    %c0_9 = arith.constant 0 : index
    %c0_10 = arith.constant 0 : index
    %37 = vector.load %arg17[%c0_9, %c0_10] : memref<8x512xbf16, #tpu.memory_space<vmem>>, vector<8x384xbf16>
    tpu.vector_store %arg17[%c0_9, %c0_10], %36 {strides = array<i32>} : memref<8x512xbf16, #tpu.memory_space<vmem>>, vector<8x384xbf16>,
    %38 = arith.truncf %5 : vector<8x128xf32> to vector<8x128xbf16>
    %c0_11 = arith.constant 0 : index
    %c384 = arith.constant 384 : index
    %39 = vector.load %arg17[%c0_11, %c384] : memref<8x512xbf16, #tpu.memory_space<vmem>>, vector<8x128xbf16>
    tpu.vector_store %arg17[%c0_11, %c384], %38 {strides = array<i32>} : memref<8x512xbf16, #tpu.memory_space<vmem>>, vector<8x128xbf16>,
    %c0_12 = arith.constant 0 : index
    %c0_13 = arith.constant 0 : index
    %40 = vector.load %arg17[%c0_12, %c0_13] : memref<8x512xbf16, #tpu.memory_space<vmem>>, vector<8x512xbf16>
    %c0_14 = arith.constant 0 : index
    %c0_15 = arith.constant 0 : index
    %41 = vector.load %arg5[%c0_14, %c0_15] : memref<512x256xbf16, #tpu.memory_space<vmem>>, vector<512x256xbf16>
    %cst_16 = arith.constant dense<0.000000e+00> : vector<8x256xf32>
    %42 = tpu.matmul %40, %41, %cst_16 {dimension_numbers = #tpu.dot_dimension_numbers<[1], [0], [0], [1], [0, 0, 1, 1], [], []>} : vector<8x512xbf16>, vector<512x256xbf16>, vector<8x256xf32> -> vector<8x256xf32>
    %c0_17 = arith.constant 0 : index
    %c0_18 = arith.constant 0 : index
    %43 = vector.load %arg6[%c0_17, %c0_18] : memref<1x256xf32, #tpu.memory_space<vmem>>, vector<1x256xf32>
    %44 = vector.broadcast %43 : vector<1x256xf32> to vector<8x256xf32>
    %45 = arith.addf %42, %44 : vector<8x256xf32>
    %46 = vector.extract_strided_slice %45 {offsets = [0, 0], sizes = [8, 128], strides = [1, 1]} : vector<8x256xf32> to vector<8x128xf32>
    %47 = arith.negf %46 : vector<8x128xf32>
    %48 = math.exp %47 : vector<8x128xf32>
    %cst_19 = arith.constant 1.000000e+00 : f32
    %49 = vector.broadcast %cst_19 : f32 to vector<8x128xf32>
    %50 = arith.addf %49, %48 : vector<8x128xf32>
    %51 = arith.divf %49, %50 : vector<8x128xf32>
    %52 = vector.extract_strided_slice %45 {offsets = [0, 128], sizes = [8, 128], strides = [1, 1]} : vector<8x256xf32> to vector<8x128xf32>
    %53 = arith.negf %52 : vector<8x128xf32>
    %54 = math.exp %53 : vector<8x128xf32>
    %cst_20 = arith.constant 1.000000e+00 : f32
    %55 = vector.broadcast %cst_20 : f32 to vector<8x128xf32>
    %56 = arith.addf %55, %54 : vector<8x128xf32>
    %57 = arith.divf %55, %56 : vector<8x128xf32>
    %58 = arith.truncf %35 : vector<8x384xf32> to vector<8x384xbf16>
    %c0_21 = arith.constant 0 : index
    %c0_22 = arith.constant 0 : index
    %59 = vector.load %arg7[%c0_21, %c0_22] : memref<384x128xbf16, #tpu.memory_space<vmem>>, vector<384x128xbf16>
    %cst_23 = arith.constant dense<0.000000e+00> : vector<8x128xf32>
    %60 = tpu.matmul %58, %59, %cst_23 {dimension_numbers = #tpu.dot_dimension_numbers<[1], [0], [0], [1], [0, 0, 1, 1], [], []>} : vector<8x384xbf16>, vector<384x128xbf16>, vector<8x128xf32> -> vector<8x128xf32>
    %c0_24 = arith.constant 0 : index
    %c0_25 = arith.constant 0 : index
    %61 = vector.load %arg8[%c0_24, %c0_25] : memref<1x128xf32, #tpu.memory_space<vmem>>, vector<1x128xf32>
    %62 = vector.broadcast %61 : vector<1x128xf32> to vector<8x128xf32>
    %63 = arith.addf %60, %62 : vector<8x128xf32>
    %64 = arith.truncf %5 : vector<8x128xf32> to vector<8x128xbf16>
    %c0_26 = arith.constant 0 : index
    %c0_27 = arith.constant 0 : index
    %65 = vector.load %arg9[%c0_26, %c0_27] : memref<128x128xbf16, #tpu.memory_space<vmem>>, vector<128x128xbf16>
    %cst_28 = arith.constant dense<0.000000e+00> : vector<8x128xf32>
    %66 = tpu.matmul %64, %65, %cst_28 {dimension_numbers = #tpu.dot_dimension_numbers<[1], [0], [0], [1], [0, 0, 1, 1], [], []>} : vector<8x128xbf16>, vector<128x128xbf16>, vector<8x128xf32> -> vector<8x128xf32>
    %c0_29 = arith.constant 0 : index
    %c0_30 = arith.constant 0 : index
    %67 = vector.load %arg10[%c0_29, %c0_30] : memref<1x128xf32, #tpu.memory_space<vmem>>, vector<1x128xf32>
    %68 = vector.broadcast %67 : vector<1x128xf32> to vector<8x128xf32>
    %69 = arith.addf %66, %68 : vector<8x128xf32>
    %70 = arith.mulf %51, %69 : vector<8x128xf32>
    %71 = arith.addf %63, %70 : vector<8x128xf32>
    %72 = math.tanh %71 : vector<8x128xf32>
    %cst_31 = arith.constant 1.000000e+00 : f32
    %73 = vector.broadcast %cst_31 : f32 to vector<8x128xf32>
    %74 = arith.subf %73, %57 : vector<8x128xf32>
    %75 = arith.mulf %74, %72 : vector<8x128xf32>
    %76 = arith.mulf %57, %5 : vector<8x128xf32>
    %77 = arith.addf %75, %76 : vector<8x128xf32>
    %c0_32 = arith.constant 0 : index
    %c0_33 = arith.constant 0 : index
    %78 = vector.load %arg16[%c0_32, %c0_33] : memref<8x128xf32, #tpu.memory_space<vmem>>, vector<8x128xf32>
    tpu.vector_store %arg16[%c0_32, %c0_33], %77 {strides = array<i32>} : memref<8x128xf32, #tpu.memory_space<vmem>>, vector<8x128xf32>,
    %79 = arith.truncf %77 : vector<8x128xf32> to vector<8x128xbf16>
    %c0_34 = arith.constant 0 : index
    %c0_35 = arith.constant 0 : index
    %80 = vector.load %arg11[%c0_34, %c0_35] : memref<128x64xbf16, #tpu.memory_space<vmem>>, vector<128x64xbf16>
    %cst_36 = arith.constant dense<0.000000e+00> : vector<8x64xf32>
    %81 = tpu.matmul %79, %80, %cst_36 {dimension_numbers = #tpu.dot_dimension_numbers<[1], [0], [0], [1], [0, 0, 1, 1], [], []>} : vector<8x128xbf16>, vector<128x64xbf16>, vector<8x64xf32> -> vector<8x64xf32>
    %c0_37 = arith.constant 0 : index
    %c0_38 = arith.constant 0 : index
    %82 = vector.load %arg12[%c0_37, %c0_38] : memref<1x64xf32, #tpu.memory_space<vmem>>, vector<1x64xf32>
    %83 = vector.broadcast %82 : vector<1x64xf32> to vector<8x64xf32>
    %84 = arith.addf %81, %83 : vector<8x64xf32>
    %cst_39 = arith.constant 0.000000e+00 : f32
    %85 = vector.broadcast %cst_39 : f32 to vector<8x64xf32>
    %86 = arith.maximumf %84, %85 : vector<8x64xf32>
    %87 = arith.truncf %86 : vector<8x64xf32> to vector<8x64xbf16>
    %c0_40 = arith.constant 0 : index
    %c0_41 = arith.constant 0 : index
    %88 = vector.load %arg13[%c0_40, %c0_41] : memref<64x128xbf16, #tpu.memory_space<vmem>>, vector<64x128xbf16>
    %cst_42 = arith.constant dense<0.000000e+00> : vector<8x128xf32>
    %89 = tpu.matmul %87, %88, %cst_42 {dimension_numbers = #tpu.dot_dimension_numbers<[1], [0], [0], [1], [0, 0, 1, 1], [], []>} : vector<8x64xbf16>, vector<64x128xbf16>, vector<8x128xf32> -> vector<8x128xf32>
    %c0_43 = arith.constant 0 : index
    %c0_44 = arith.constant 0 : index
    %90 = vector.load %arg14[%c0_43, %c0_44] : memref<1x128xf32, #tpu.memory_space<vmem>>, vector<1x128xf32>
    %91 = vector.broadcast %90 : vector<1x128xf32> to vector<8x128xf32>
    %92 = arith.addf %89, %91 : vector<8x128xf32>
    %c0_45 = arith.constant 0 : index
    %c0_46 = arith.constant 0 : index
    %c0_47 = arith.constant 0 : index
    %93 = vector.load %arg15[%c0_45, %c0_46, %c0_47] : memref<1x8x128xf32, #tpu.memory_space<vmem>>, vector<1x8x128xf32>
    %94 = vector.shape_cast %93 : vector<1x8x128xf32> to vector<8x128xf32>
    %95 = vector.shape_cast %92 : vector<8x128xf32> to vector<1x8x128xf32>
    tpu.vector_store %arg15[%c0_45, %c0_46, %c0_47], %95 {strides = array<i32>} : memref<1x8x128xf32, #tpu.memory_space<vmem>>, vector<1x8x128xf32>,
    return
  }
  func.func @transform_0(%arg0: i32) -> (i32, i32, i32) {
    %c0_i32 = arith.constant 0 : i32
    %c0_i32_0 = arith.constant 0 : i32
    %c0_i32_1 = arith.constant 0 : i32
    return %arg0, %c0_i32, %c0_i32_0 : i32, i32, i32
  }
  func.func @transform_1(%arg0: i32) -> (i32, i32) {
    %c0_i32 = arith.constant 0 : i32
    %c0_i32_0 = arith.constant 0 : i32
    %c0_i32_1 = arith.constant 0 : i32
    return %c0_i32, %c0_i32_0 : i32, i32
  }
  func.func @transform_2(%arg0: i32) -> (i32, i32) {
    %c0_i32 = arith.constant 0 : i32
    %c0_i32_0 = arith.constant 0 : i32
    %c0_i32_1 = arith.constant 0 : i32
    return %c0_i32, %c0_i32_0 : i32, i32
  }
  func.func @transform_3(%arg0: i32) -> (i32, i32) {
    %c0_i32 = arith.constant 0 : i32
    %c0_i32_0 = arith.constant 0 : i32
    %c0_i32_1 = arith.constant 0 : i32
    return %c0_i32, %c0_i32_0 : i32, i32
  }
  func.func @transform_4(%arg0: i32) -> (i32, i32) {
    %c0_i32 = arith.constant 0 : i32
    %c0_i32_0 = arith.constant 0 : i32
    %c0_i32_1 = arith.constant 0 : i32
    return %c0_i32, %c0_i32_0 : i32, i32
  }
  func.func @transform_5(%arg0: i32) -> (i32, i32) {
    %c0_i32 = arith.constant 0 : i32
    %c0_i32_0 = arith.constant 0 : i32
    %c0_i32_1 = arith.constant 0 : i32
    return %c0_i32, %c0_i32_0 : i32, i32
  }
  func.func @transform_6(%arg0: i32) -> (i32, i32) {
    %c0_i32 = arith.constant 0 : i32
    %c0_i32_0 = arith.constant 0 : i32
    %c0_i32_1 = arith.constant 0 : i32
    return %c0_i32, %c0_i32_0 : i32, i32
  }
  func.func @transform_7(%arg0: i32) -> (i32, i32) {
    %c0_i32 = arith.constant 0 : i32
    %c0_i32_0 = arith.constant 0 : i32
    %c0_i32_1 = arith.constant 0 : i32
    return %c0_i32, %c0_i32_0 : i32, i32
  }
  func.func @transform_8(%arg0: i32) -> (i32, i32) {
    %c0_i32 = arith.constant 0 : i32
    %c0_i32_0 = arith.constant 0 : i32
    %c0_i32_1 = arith.constant 0 : i32
    return %c0_i32, %c0_i32_0 : i32, i32
  }
  func.func @transform_9(%arg0: i32) -> (i32, i32) {
    %c0_i32 = arith.constant 0 : i32
    %c0_i32_0 = arith.constant 0 : i32
    %c0_i32_1 = arith.constant 0 : i32
    return %c0_i32, %c0_i32_0 : i32, i32
  }
  func.func @transform_10(%arg0: i32) -> (i32, i32) {
    %c0_i32 = arith.constant 0 : i32
    %c0_i32_0 = arith.constant 0 : i32
    %c0_i32_1 = arith.constant 0 : i32
    return %c0_i32, %c0_i32_0 : i32, i32
  }
  func.func @transform_11(%arg0: i32) -> (i32, i32) {
    %c0_i32 = arith.constant 0 : i32
    %c0_i32_0 = arith.constant 0 : i32
    %c0_i32_1 = arith.constant 0 : i32
    return %c0_i32, %c0_i32_0 : i32, i32
  }
  func.func @transform_12(%arg0: i32) -> (i32, i32) {
    %c0_i32 = arith.constant 0 : i32
    %c0_i32_0 = arith.constant 0 : i32
    %c0_i32_1 = arith.constant 0 : i32
    return %c0_i32, %c0_i32_0 : i32, i32
  }
  func.func @transform_13(%arg0: i32) -> (i32, i32) {
    %c0_i32 = arith.constant 0 : i32
    %c0_i32_0 = arith.constant 0 : i32
    %c0_i32_1 = arith.constant 0 : i32
    return %c0_i32, %c0_i32_0 : i32, i32
  }
  func.func @transform_14(%arg0: i32) -> (i32, i32, i32) {
    %c0_i32 = arith.constant 0 : i32
    %c0_i32_0 = arith.constant 0 : i32
    %c0_i32_1 = arith.constant 0 : i32
    return %arg0, %c0_i32, %c0_i32_0 : i32, i32, i32
  }
  func.func @transform_15(%arg0: i32) -> (i32, i32) {
    %c0_i32 = arith.constant 0 : i32
    %c0_i32_0 = arith.constant 0 : i32
    %c0_i32_1 = arith.constant 0 : i32
    return %c0_i32, %c0_i32_0 : i32, i32
  }
}

</mosaic_0001>

<llo_original>
// kernel: tpu_custom_call.1
$region0: #{tpu_custom_call.1}
  #allocation0 [shape = 'u32[]', space=smem, size = 0x4, offset = 0x4, fixed_abs, tag = 'smem constant byte address 0x4 - core index']
  #allocation1 [shape = 'u32[144,128]{1,0:T(1,128)}', space=vmem, size = 0x12000, scoped, tag = 'internal scratch']
  #allocation2 [shape = 'bf16[8,512]{1,0:T(8,128)(2,1)}', space=vmem, size = 0x2000, scoped, tag = 'scratch operand']
  %s0 = inlined_call_operand.vmem [shape: f32[4,8,4], index: 0, kind: input, shape index: {}]
  %s1 = inlined_call_operand.hbm [shape: f32[8,128], index: 1, kind: input, shape index: {}, may-alias: {1,15}]
  %s2 = inlined_call_operand.vmem [shape: f32[4,384], index: 2, kind: input, shape index: {}]
  %s3 = inlined_call_operand.vmem [shape: f32[1,384], index: 3, kind: input, shape index: {}]
  %s4 = inlined_call_operand.hbm [shape: bf16[512,256], index: 4, kind: input, shape index: {}]
  %s5 = inlined_call_operand.vmem [shape: f32[1,256], index: 5, kind: input, shape index: {}]
  %s6 = inlined_call_operand.hbm [shape: bf16[384,128], index: 6, kind: input, shape index: {}]
  %s7 = inlined_call_operand.vmem [shape: f32[1,128], index: 7, kind: input, shape index: {}]
  %s8 = inlined_call_operand.vmem [shape: bf16[128,128], index: 8, kind: input, shape index: {}]
  %s9 = inlined_call_operand.vmem [shape: f32[1,128], index: 9, kind: input, shape index: {}]
  %s10 = inlined_call_operand.vmem [shape: bf16[128,64], index: 10, kind: input, shape index: {}]
  %s11 = inlined_call_operand.vmem [shape: f32[1,64], index: 11, kind: input, shape index: {}]
  %s12 = inlined_call_operand.vmem [shape: bf16[64,128], index: 12, kind: input, shape index: {}]
  %s13 = inlined_call_operand.vmem [shape: f32[1,128], index: 13, kind: input, shape index: {}]
  %s14 = inlined_call_operand.hbm [shape: f32[4,8,128], index: 14, kind: output, shape index: {0}]
  %s15 = inlined_call_operand.hbm [shape: f32[8,128], index: 15, kind: output, shape index: {1}, may-alias: {1,15}]
  %16 = xla_tuple %s14, %s15
  %s17 = sld [smem:[#allocation0]]
  $region113: #{tpu_custom_call.1} parent=0
    _
  %s19 = ssub.s32 1, %s17
  %s20 = scalar_select 0, %s19, %s17
  $region1: #{tpu_custom_call.1} parent=0
    #allocation3 [shape = 'u8[4096]{0}', space=vmem, size = 0x1000, scoped, tag = 'input window, operand 1, single buffered']
    #allocation4 [shape = 's32[2]{0}', space=sflag, size = 0x8, scoped, tag = 'scoped memory for tpu_custom_call.1']
    #allocation5 [shape = 's32[2]{0}', space=sflag, size = 0x8, scoped, tag = 'scoped memory for tpu_custom_call.1']
    #allocation6 [shape = 'u8[262144]{0}', space=vmem, size = 0x40000, scoped, tag = 'input window, operand 4, single buffered']
    #allocation7 [shape = 's32[1]{0}', space=sflag, size = 0x4, scoped, tag = 'scoped memory for tpu_custom_call.1']
    #allocation8 [shape = 'u8[98304]{0}', space=vmem, size = 0x18000, scoped, tag = 'input window, operand 6, single buffered']
    #allocation9 [shape = 'u8[8192]{0}', space=vmem, size = 0x2000, scoped, tag = 'output window, operand 0']
    #allocation10 [shape = 'u8[4096]{0}', space=vmem, size = 0x1000, scoped, tag = 'output window, operand 1, single buffered']
    #allocation11 [shape = 's32[1]{0}', space=sflag, size = 0x4, scoped, tag = 'scoped memory for tpu_custom_call.1']
    %21 = vsyncpa [#allocation4], 0
    %22 = vsyncpa [#allocation7], 0
    %23 = vsyncpa [#allocation5], 0
    %s24 = scalar_lea.sflag [#allocation5], 1
    %25 = vsyncpa %s24, 0
    %26 = vsyncpa [#allocation11], 0
    loop: start=0, step=1, limit=6
    $region2: #{tpu_custom_call.1} parent=1 // loop_pre_header
      _
    $region3: #{tpu_custom_call.1} parent=1 // loop_header
      %s28 = sphi 0, %s32
      %p29 = scmp.ge.s32.totalorder %s28, 6
      %s38 = sphi 0, %s40
      %s41 = sphi 0, %s38
      %s42 = sphi 0, %s41
      %s58 = sphi 0, %s42
      %s62 = sphi 0, %s62
      %s64 = sphi 0, %s62
      %s65 = sphi 0, %s64
      %s79 = sphi 0, %s65
      %s83 = sphi 0, %s83
      %s85 = sphi 0, %s83
      %s86 = sphi 0, %s85
      %s100 = sphi 0, %s86
      %s104 = sphi 0, %s104
      %s106 = sphi 0, %s104
      %s107 = sphi 0, %s106
      %s121 = sphi 0, %s107
      %s125 = sphi 0, %s125
      %s127 = sphi 0, %s125
      %s128 = sphi 0, %s127
      %s142 = sphi 0, %s128
      %s146 = sphi 0, %s146
      %s148 = sphi 0, %s146
      %s149 = sphi 0, %s148
      %s163 = sphi 0, %s149
      %s167 = sphi 0, %s167
      %s169 = sphi 0, %s167
      %s170 = sphi 0, %s169
      %s184 = sphi 0, %s170
      %s188 = sphi 0, %s188
      %s190 = sphi 0, %s188
      %s191 = sphi 0, %s190
      %s205 = sphi 0, %s191
      %s209 = sphi 0, %s209
      %s211 = sphi 0, %s209
      %s212 = sphi 0, %s211
      %s226 = sphi 0, %s212
      %s230 = sphi 0, %s230
      %s232 = sphi 0, %s230
      %s233 = sphi 0, %s232
      %s247 = sphi 0, %s233
      %s251 = sphi 0, %s251
      %s253 = sphi 0, %s251
      %s254 = sphi 0, %s253
      %s268 = sphi 0, %s254
      %s272 = sphi 0, %s272
      %s274 = sphi 0, %s272
      %s275 = sphi 0, %s274
      %s289 = sphi 0, %s275
      %s293 = sphi 0, %s293
      %s295 = sphi 0, %s293
      %s296 = sphi 0, %s295
      %s310 = sphi 0, %s296
      %s314 = sphi 0, %s314
      %s316 = sphi 0, %s314
      %s317 = sphi 0, %s316
      %s331 = sphi 0, %s317
      %s337 = sphi 0, %s339
      %s340 = sphi 0, %s337
      %s341 = sphi 0, %s340
      %s357 = sphi 0, %s341
      %s361 = sphi 0, %s361
      %s363 = sphi 0, %s361
      %s364 = sphi 0, %s363
      %s378 = sphi 0, %s364
    $region4: #{tpu_custom_call.1} parent=1 // loop_header_branch
      %31 = sbr.rel (%p29) target = $region8
    $region5: #{tpu_custom_call.1} parent=1 // loop_body
      %s33 = ssub.s32 %s28, 1
      %s34 = ssub.s32 %s28, 2
      %s35 = sadd.s32 %s28, 1
      %s36 = ssub.s32 %s28, %s35
      %p37 = scmp.eq.s32.totalorder %s36, 0
      %s39 = sadd.s32 %s38, 1
      %s40 = scalar_select %p37, %s38, %s39
      %p43 = pneg %p37
      %p44 = scmp.eq.s32.totalorder %s28, 3
      %p45 = por %p43, %p44
      %p46 = scmp.ne.s32.totalorder %s38, %s41
      %p47 = scmp.eq.s32.totalorder %s28, 0
      %p48 = por %p46, %p47
      %p49 = scmp.ne.s32.totalorder %s38, %s41
      %p50 = scmp.eq.s32.totalorder %s33, 3
      %p51 = por %p49, %p50
      %p52 = scmp.ne.s32.totalorder %s41, %s42
      %p53 = scmp.eq.s32.totalorder %s33, 0
      %p54 = por %p52, %p53
      %p55 = scmp.ne.s32.totalorder %s41, %s42
      %p56 = scmp.eq.s32.totalorder %s34, 3
      %p57 = por %p55, %p56
      %p59 = scmp.ne.s32.totalorder %s42, %s58
      %p60 = scmp.eq.s32.totalorder %s34, 0
      %p61 = por %p59, %p60
      %s63 = sadd.s32 %s62, 1
      %p66 = scmp.eq.s32.totalorder %s28, 3
      %p67 = scmp.ne.s32.totalorder %s62, %s64
      %p68 = scmp.eq.s32.totalorder %s28, 0
      %p69 = por %p67, %p68
      %p70 = scmp.ne.s32.totalorder %s62, %s64
      %p71 = scmp.eq.s32.totalorder %s33, 3
      %p72 = por %p70, %p71
      %p73 = scmp.ne.s32.totalorder %s64, %s65
      %p74 = scmp.eq.s32.totalorder %s33, 0
      %p75 = por %p73, %p74
      %p76 = scmp.ne.s32.totalorder %s64, %s65
      %p77 = scmp.eq.s32.totalorder %s34, 3
      %p78 = por %p76, %p77
      %p80 = scmp.ne.s32.totalorder %s65, %s79
      %p81 = scmp.eq.s32.totalorder %s34, 0
      %p82 = por %p80, %p81
      %s84 = sadd.s32 %s83, 1
      %p87 = scmp.eq.s32.totalorder %s28, 3
      %p88 = scmp.ne.s32.totalorder %s83, %s85
      %p89 = scmp.eq.s32.totalorder %s28, 0
      %p90 = por %p88, %p89
      %p91 = scmp.ne.s32.totalorder %s83, %s85
      %p92 = scmp.eq.s32.totalorder %s33, 3
      %p93 = por %p91, %p92
      %p94 = scmp.ne.s32.totalorder %s85, %s86
      %p95 = scmp.eq.s32.totalorder %s33, 0
      %p96 = por %p94, %p95
      %p97 = scmp.ne.s32.totalorder %s85, %s86
      %p98 = scmp.eq.s32.totalorder %s34, 3
      %p99 = por %p97, %p98
      %p101 = scmp.ne.s32.totalorder %s86, %s100
      %p102 = scmp.eq.s32.totalorder %s34, 0
      %p103 = por %p101, %p102
      %s105 = sadd.s32 %s104, 1
      %p108 = scmp.eq.s32.totalorder %s28, 3
      %p109 = scmp.ne.s32.totalorder %s104, %s106
      %p110 = scmp.eq.s32.totalorder %s28, 0
      %p111 = por %p109, %p110
      %p112 = scmp.ne.s32.totalorder %s104, %s106
      %p113 = scmp.eq.s32.totalorder %s33, 3
      %p114 = por %p112, %p113
      %p115 = scmp.ne.s32.totalorder %s106, %s107
      %p116 = scmp.eq.s32.totalorder %s33, 0
      %p117 = por %p115, %p116
      %p118 = scmp.ne.s32.totalorder %s106, %s107
      %p119 = scmp.eq.s32.totalorder %s34, 3
      %p120 = por %p118, %p119
      %p122 = scmp.ne.s32.totalorder %s107, %s121
      %p123 = scmp.eq.s32.totalorder %s34, 0
      %p124 = por %p122, %p123
      %s126 = sadd.s32 %s125, 1
      %p129 = scmp.eq.s32.totalorder %s28, 3
      %p130 = scmp.ne.s32.totalorder %s125, %s127
      %p131 = scmp.eq.s32.totalorder %s28, 0
      %p132 = por %p130, %p131
      %p133 = scmp.ne.s32.totalorder %s125, %s127
      %p134 = scmp.eq.s32.totalorder %s33, 3
      %p135 = por %p133, %p134
      %p136 = scmp.ne.s32.totalorder %s127, %s128
      %p137 = scmp.eq.s32.totalorder %s33, 0
      %p138 = por %p136, %p137
      %p139 = scmp.ne.s32.totalorder %s127, %s128
      %p140 = scmp.eq.s32.totalorder %s34, 3
      %p141 = por %p139, %p140
      %p143 = scmp.ne.s32.totalorder %s128, %s142
      %p144 = scmp.eq.s32.totalorder %s34, 0
      %p145 = por %p143, %p144
      %s147 = sadd.s32 %s146, 1
      %p150 = scmp.eq.s32.totalorder %s28, 3
      %p151 = scmp.ne.s32.totalorder %s146, %s148
      %p152 = scmp.eq.s32.totalorder %s28, 0
      %p153 = por %p151, %p152
      %p154 = scmp.ne.s32.totalorder %s146, %s148
      %p155 = scmp.eq.s32.totalorder %s33, 3
      %p156 = por %p154, %p155
      %p157 = scmp.ne.s32.totalorder %s148, %s149
      %p158 = scmp.eq.s32.totalorder %s33, 0
      %p159 = por %p157, %p158
      %p160 = scmp.ne.s32.totalorder %s148, %s149
      %p161 = scmp.eq.s32.totalorder %s34, 3
      %p162 = por %p160, %p161
      %p164 = scmp.ne.s32.totalorder %s149, %s163
      %p165 = scmp.eq.s32.totalorder %s34, 0
      %p166 = por %p164, %p165
      %s168 = sadd.s32 %s167, 1
      %p171 = scmp.eq.s32.totalorder %s28, 3
      %p172 = scmp.ne.s32.totalorder %s167, %s169
      %p173 = scmp.eq.s32.totalorder %s28, 0
      %p174 = por %p172, %p173
      %p175 = scmp.ne.s32.totalorder %s167, %s169
      %p176 = scmp.eq.s32.totalorder %s33, 3
      %p177 = por %p175, %p176
      %p178 = scmp.ne.s32.totalorder %s169, %s170
      %p179 = scmp.eq.s32.totalorder %s33, 0
      %p180 = por %p178, %p179
      %p181 = scmp.ne.s32.totalorder %s169, %s170
      %p182 = scmp.eq.s32.totalorder %s34, 3
      %p183 = por %p181, %p182
      %p185 = scmp.ne.s32.totalorder %s170, %s184
      %p186 = scmp.eq.s32.totalorder %s34, 0
      %p187 = por %p185, %p186
      %s189 = sadd.s32 %s188, 1
      %p192 = scmp.eq.s32.totalorder %s28, 3
      %p193 = scmp.ne.s32.totalorder %s188, %s190
      %p194 = scmp.eq.s32.totalorder %s28, 0
      %p195 = por %p193, %p194
      %p196 = scmp.ne.s32.totalorder %s188, %s190
      %p197 = scmp.eq.s32.totalorder %s33, 3
      %p198 = por %p196, %p197
      %p199 = scmp.ne.s32.totalorder %s190, %s191
      %p200 = scmp.eq.s32.totalorder %s33, 0
      %p201 = por %p199, %p200
      %p202 = scmp.ne.s32.totalorder %s190, %s191
      %p203 = scmp.eq.s32.totalorder %s34, 3
      %p204 = por %p202, %p203
      %p206 = scmp.ne.s32.totalorder %s191, %s205
      %p207 = scmp.eq.s32.totalorder %s34, 0
      %p208 = por %p206, %p207
      %s210 = sadd.s32 %s209, 1
      %p213 = scmp.eq.s32.totalorder %s28, 3
      %p214 = scmp.ne.s32.totalorder %s209, %s211
      %p215 = scmp.eq.s32.totalorder %s28, 0
      %p216 = por %p214, %p215
      %p217 = scmp.ne.s32.totalorder %s209, %s211
      %p218 = scmp.eq.s32.totalorder %s33, 3
      %p219 = por %p217, %p218
      %p220 = scmp.ne.s32.totalorder %s211, %s212
      %p221 = scmp.eq.s32.totalorder %s33, 0
      %p222 = por %p220, %p221
      %p223 = scmp.ne.s32.totalorder %s211, %s212
      %p224 = scmp.eq.s32.totalorder %s34, 3
      %p225 = por %p223, %p224
      %p227 = scmp.ne.s32.totalorder %s212, %s226
      %p228 = scmp.eq.s32.totalorder %s34, 0
      %p229 = por %p227, %p228
      %s231 = sadd.s32 %s230, 1
      %p234 = scmp.eq.s32.totalorder %s28, 3
      %p235 = scmp.ne.s32.totalorder %s230, %s232
      %p236 = scmp.eq.s32.totalorder %s28, 0
      %p237 = por %p235, %p236
      %p238 = scmp.ne.s32.totalorder %s230, %s232
      %p239 = scmp.eq.s32.totalorder %s33, 3
      %p240 = por %p238, %p239
      %p241 = scmp.ne.s32.totalorder %s232, %s233
      %p242 = scmp.eq.s32.totalorder %s33, 0
      %p243 = por %p241, %p242
      %p244 = scmp.ne.s32.totalorder %s232, %s233
      %p245 = scmp.eq.s32.totalorder %s34, 3
      %p246 = por %p244, %p245
      %p248 = scmp.ne.s32.totalorder %s233, %s247
      %p249 = scmp.eq.s32.totalorder %s34, 0
      %p250 = por %p248, %p249
      %s252 = sadd.s32 %s251, 1
      %p255 = scmp.eq.s32.totalorder %s28, 3
      %p256 = scmp.ne.s32.totalorder %s251, %s253
      %p257 = scmp.eq.s32.totalorder %s28, 0
      %p258 = por %p256, %p257
      %p259 = scmp.ne.s32.totalorder %s251, %s253
      %p260 = scmp.eq.s32.totalorder %s33, 3
      %p261 = por %p259, %p260
      %p262 = scmp.ne.s32.totalorder %s253, %s254
      %p263 = scmp.eq.s32.totalorder %s33, 0
      %p264 = por %p262, %p263
      %p265 = scmp.ne.s32.totalorder %s253, %s254
      %p266 = scmp.eq.s32.totalorder %s34, 3
      %p267 = por %p265, %p266
      %p269 = scmp.ne.s32.totalorder %s254, %s268
      %p270 = scmp.eq.s32.totalorder %s34, 0
      %p271 = por %p269, %p270
      %s273 = sadd.s32 %s272, 1
      %p276 = scmp.eq.s32.totalorder %s28, 3
      %p277 = scmp.ne.s32.totalorder %s272, %s274
      %p278 = scmp.eq.s32.totalorder %s28, 0
      %p279 = por %p277, %p278
      %p280 = scmp.ne.s32.totalorder %s272, %s274
      %p281 = scmp.eq.s32.totalorder %s33, 3
      %p282 = por %p280, %p281
      %p283 = scmp.ne.s32.totalorder %s274, %s275
      %p284 = scmp.eq.s32.totalorder %s33, 0
      %p285 = por %p283, %p284
      %p286 = scmp.ne.s32.totalorder %s274, %s275
      %p287 = scmp.eq.s32.totalorder %s34, 3
      %p288 = por %p286, %p287
      %p290 = scmp.ne.s32.totalorder %s275, %s289
      %p291 = scmp.eq.s32.totalorder %s34, 0
      %p292 = por %p290, %p291
      %s294 = sadd.s32 %s293, 1
      %p297 = scmp.eq.s32.totalorder %s28, 3
      %p298 = scmp.ne.s32.totalorder %s293, %s295
      %p299 = scmp.eq.s32.totalorder %s28, 0
      %p300 = por %p298, %p299
      %p301 = scmp.ne.s32.totalorder %s293, %s295
      %p302 = scmp.eq.s32.totalorder %s33, 3
      %p303 = por %p301, %p302
      %p304 = scmp.ne.s32.totalorder %s295, %s296
      %p305 = scmp.eq.s32.totalorder %s33, 0
      %p306 = por %p304, %p305
      %p307 = scmp.ne.s32.totalorder %s295, %s296
      %p308 = scmp.eq.s32.totalorder %s34, 3
      %p309 = por %p307, %p308
      %p311 = scmp.ne.s32.totalorder %s296, %s310
      %p312 = scmp.eq.s32.totalorder %s34, 0
      %p313 = por %p311, %p312
      %s315 = sadd.s32 %s314, 1
      %p318 = scmp.eq.s32.totalorder %s28, 3
      %p319 = scmp.ne.s32.totalorder %s314, %s316
      %p320 = scmp.eq.s32.totalorder %s28, 0
      %p321 = por %p319, %p320
      %p322 = scmp.ne.s32.totalorder %s314, %s316
      %p323 = scmp.eq.s32.totalorder %s33, 3
      %p324 = por %p322, %p323
      %p325 = scmp.ne.s32.totalorder %s316, %s317
      %p326 = scmp.eq.s32.totalorder %s33, 0
      %p327 = por %p325, %p326
      %p328 = scmp.ne.s32.totalorder %s316, %s317
      %p329 = scmp.eq.s32.totalorder %s34, 3
      %p330 = por %p328, %p329
      %p332 = scmp.ne.s32.totalorder %s317, %s331
      %p333 = scmp.eq.s32.totalorder %s34, 0
      %p334 = por %p332, %p333
      %s335 = ssub.s32 %s28, %s35
      %p336 = scmp.eq.s32.totalorder %s335, 0
      %s338 = sadd.s32 %s337, 1
      %s339 = scalar_select %p336, %s337, %s338
      %p342 = pneg %p336
      %p343 = scmp.eq.s32.totalorder %s28, 3
      %p344 = por %p342, %p343
      %p345 = scmp.ne.s32.totalorder %s337, %s340
      %p346 = scmp.eq.s32.totalorder %s28, 0
      %p347 = por %p345, %p346
      %p348 = scmp.ne.s32.totalorder %s337, %s340
      %p349 = scmp.eq.s32.totalorder %s33, 3
      %p350 = por %p348, %p349
      %p351 = scmp.ne.s32.totalorder %s340, %s341
      %p352 = scmp.eq.s32.totalorder %s33, 0
      %p353 = por %p351, %p352
      %p354 = scmp.ne.s32.totalorder %s340, %s341
      %p355 = scmp.eq.s32.totalorder %s34, 3
      %p356 = por %p354, %p355
      %p358 = scmp.ne.s32.totalorder %s341, %s357
      %p359 = scmp.eq.s32.totalorder %s34, 0
      %p360 = por %p358, %p359
      %s362 = sadd.s32 %s361, 1
      %p365 = scmp.eq.s32.totalorder %s28, 3
      %p366 = scmp.ne.s32.totalorder %s361, %s363
      %p367 = scmp.eq.s32.totalorder %s28, 0
      %p368 = por %p366, %p367
      %p369 = scmp.ne.s32.totalorder %s361, %s363
      %p370 = scmp.eq.s32.totalorder %s33, 3
      %p371 = por %p369, %p370
      %p372 = scmp.ne.s32.totalorder %s363, %s364
      %p373 = scmp.eq.s32.totalorder %s33, 0
      %p374 = por %p372, %p373
      %p375 = scmp.ne.s32.totalorder %s363, %s364
      %p376 = scmp.eq.s32.totalorder %s34, 3
      %p377 = por %p375, %p376
      %p379 = scmp.ne.s32.totalorder %s364, %s378
      %p380 = scmp.eq.s32.totalorder %s34, 0
      %p381 = por %p379, %p380
      %p382 = scmp.le.s32.totalorder 1, %s28
      %p383 = scmp.lt.s32.totalorder %s28, 5
      %p384 = pnand %p382, %p383
      %p385 = pneg %p384
      // Predicated region
      $region9: #{tpu_custom_call.1} parent=5 // pred_check
        _
      $region10: #{tpu_custom_call.1} parent=5 // pred_check_branch
        %387 = sbr.rel (%p384) target = $region12
      $region11: #{tpu_custom_call.1} parent=5 // pred_region
        %s388 = ssub.s32 %s28, 1
        // Predicated region
        $region13: #{tpu_custom_call.1} parent=11 // pred_check
          %p389 = pneg %p75
        $region14: #{tpu_custom_call.1} parent=11 // pred_check_branch
          %391 = sbr.rel (%p389) target = $region16
        $region15: #{tpu_custom_call.1} parent=11 // pred_region
          %s393 = ssub.s32 128, 128
          %394 = vsyncadd [#allocation4], %s393
          %s396 = sshll.u32 [#allocation3], 4
          %s397 = int_to_ptr.vmem [resolvable:$true] %s396
          %399 = dma.hbm_to_vmem [thread:$0]  %s1, 128, %s397, [#allocation4]
        $region16: #{tpu_custom_call.1} parent=11 // pred_fallthru
          _
        // Predicated region
        $region17: #{tpu_custom_call.1} parent=11 // pred_check
          %p400 = pneg %p96
        $region18: #{tpu_custom_call.1} parent=11 // pred_check_branch
          %402 = sbr.rel (%p400) target = $region20
        $region19: #{tpu_custom_call.1} parent=11 // pred_region
          _
        $region20: #{tpu_custom_call.1} parent=11 // pred_fallthru
          _
        // Predicated region
        $region21: #{tpu_custom_call.1} parent=11 // pred_check
          %p403 = pneg %p117
        $region22: #{tpu_custom_call.1} parent=11 // pred_check_branch
          %405 = sbr.rel (%p403) target = $region24
        $region23: #{tpu_custom_call.1} parent=11 // pred_region
          _
        $region24: #{tpu_custom_call.1} parent=11 // pred_fallthru
          _
        // Predicated region
        $region25: #{tpu_custom_call.1} parent=11 // pred_check
          %p406 = pneg %p138
        $region26: #{tpu_custom_call.1} parent=11 // pred_check_branch
          %408 = sbr.rel (%p406) target = $region28
        $region27: #{tpu_custom_call.1} parent=11 // pred_region
          %s410 = ssub.s32 8192, 8192
          %411 = vsyncadd [#allocation7], %s410
          %s412 = sshll.u32 [#allocation6], 4
          %s413 = int_to_ptr.vmem [resolvable:$true] %s412
          %418 = dma.hbm_to_vmem [thread:$0]  %s4, 8192, %s413, [#allocation7], 128, 128, 8
        $region28: #{tpu_custom_call.1} parent=11 // pred_fallthru
          _
        // Predicated region
        $region29: #{tpu_custom_call.1} parent=11 // pred_check
          %p419 = pneg %p159
        $region30: #{tpu_custom_call.1} parent=11 // pred_check_branch
          %421 = sbr.rel (%p419) target = $region32
        $region31: #{tpu_custom_call.1} parent=11 // pred_region
          _
        $region32: #{tpu_custom_call.1} parent=11 // pred_fallthru
          _
        // Predicated region
        $region33: #{tpu_custom_call.1} parent=11 // pred_check
          %p422 = pneg %p180
        $region34: #{tpu_custom_call.1} parent=11 // pred_check_branch
          %424 = sbr.rel (%p422) target = $region36
        $region35: #{tpu_custom_call.1} parent=11 // pred_region
          %s426 = ssub.s32 3072, 3072
          %427 = vsyncadd [#allocation7], %s426
          %s428 = sshll.u32 [#allocation8], 4
          %s429 = int_to_ptr.vmem [resolvable:$true] %s428
          %434 = dma.hbm_to_vmem [thread:$0]  %s6, 3072, %s429, [#allocation7], 64, 64, 4
        $region36: #{tpu_custom_call.1} parent=11 // pred_fallthru
          _
        // Predicated region
        $region37: #{tpu_custom_call.1} parent=11 // pred_check
          %p435 = pneg %p201
        $region38: #{tpu_custom_call.1} parent=11 // pred_check_branch
          %437 = sbr.rel (%p435) target = $region40
        $region39: #{tpu_custom_call.1} parent=11 // pred_region
          _
        $region40: #{tpu_custom_call.1} parent=11 // pred_fallthru
          _
        // Predicated region
        $region41: #{tpu_custom_call.1} parent=11 // pred_check
          %p438 = pneg %p222
        $region42: #{tpu_custom_call.1} parent=11 // pred_check_branch
          %440 = sbr.rel (%p438) target = $region44
        $region43: #{tpu_custom_call.1} parent=11 // pred_region
          _
        $region44: #{tpu_custom_call.1} parent=11 // pred_fallthru
          _
        // Predicated region
        $region45: #{tpu_custom_call.1} parent=11 // pred_check
          %p441 = pneg %p243
        $region46: #{tpu_custom_call.1} parent=11 // pred_check_branch
          %443 = sbr.rel (%p441) target = $region48
        $region47: #{tpu_custom_call.1} parent=11 // pred_region
          _
        $region48: #{tpu_custom_call.1} parent=11 // pred_fallthru
          _
        // Predicated region
        $region49: #{tpu_custom_call.1} parent=11 // pred_check
          %p444 = pneg %p264
        $region50: #{tpu_custom_call.1} parent=11 // pred_check_branch
          %446 = sbr.rel (%p444) target = $region52
        $region51: #{tpu_custom_call.1} parent=11 // pred_region
          _
        $region52: #{tpu_custom_call.1} parent=11 // pred_fallthru
          _
        // Predicated region
        $region53: #{tpu_custom_call.1} parent=11 // pred_check
          %p447 = pneg %p285
        $region54: #{tpu_custom_call.1} parent=11 // pred_check_branch
          %449 = sbr.rel (%p447) target = $region56
        $region55: #{tpu_custom_call.1} parent=11 // pred_region
          _
        $region56: #{tpu_custom_call.1} parent=11 // pred_fallthru
          _
        // Predicated region
        $region57: #{tpu_custom_call.1} parent=11 // pred_check
          %p450 = pneg %p306
        $region58: #{tpu_custom_call.1} parent=11 // pred_check_branch
          %452 = sbr.rel (%p450) target = $region60
        $region59: #{tpu_custom_call.1} parent=11 // pred_region
          _
        $region60: #{tpu_custom_call.1} parent=11 // pred_fallthru
          _
        // Predicated region
        $region61: #{tpu_custom_call.1} parent=11 // pred_check
          %p453 = pneg %p327
        $region62: #{tpu_custom_call.1} parent=11 // pred_check_branch
          %455 = sbr.rel (%p453) target = $region64
        $region63: #{tpu_custom_call.1} parent=11 // pred_region
          _
        $region64: #{tpu_custom_call.1} parent=11 // pred_fallthru
          _
      $region12: #{tpu_custom_call.1} parent=5 // pred_fallthru
        _
      %p456 = scmp.lt.s32.totalorder %s28, 4
      // Predicated region
      $region65: #{tpu_custom_call.1} parent=5 // pred_check
        %p457 = pneg %p456
      $region66: #{tpu_custom_call.1} parent=5 // pred_check_branch
        %459 = sbr.rel (%p457) target = $region68
      $region67: #{tpu_custom_call.1} parent=5 // pred_region
        // Predicated region
        $region69: #{tpu_custom_call.1} parent=67 // pred_check
          %p460 = pneg %p48
        $region70: #{tpu_custom_call.1} parent=67 // pred_check_branch
          %462 = sbr.rel (%p460) target = $region72
        $region71: #{tpu_custom_call.1} parent=67 // pred_region
          %p463 = scmp.lt.s32.totalorder %s28, 3
          %s464 = scalar_select %p463, %s28, 3
          %s465 = smul.addr %s464, 8
          %s466 = scalar_lea.vmem %s0, %s465
        $region72: #{tpu_custom_call.1} parent=67 // pred_fallthru
          _
      $region68: #{tpu_custom_call.1} parent=5 // pred_fallthru
        _
      %p467 = scmp.le.s32.totalorder 1, %s28
      %p468 = scmp.lt.s32.totalorder %s28, 5
      %p469 = pnand %p467, %p468
      %p470 = pneg %p469
      // Predicated region
      $region73: #{tpu_custom_call.1} parent=5 // pred_check
        _
      $region74: #{tpu_custom_call.1} parent=5 // pred_check_branch
        %472 = sbr.rel (%p469) target = $region76
      $region75: #{tpu_custom_call.1} parent=5 // pred_region
        %s473 = ssub.s32 %s28, 1
        // Predicated region
        $region77: #{tpu_custom_call.1} parent=75 // pred_check
          %p474 = pneg %p75
        $region78: #{tpu_custom_call.1} parent=75 // pred_check_branch
          %476 = sbr.rel (%p474) target = $region80
        $region79: #{tpu_custom_call.1} parent=75 // pred_region
          %477 = dma.done [#allocation4], 128
        $region80: #{tpu_custom_call.1} parent=75 // pred_fallthru
          _
        // Predicated region
        $region81: #{tpu_custom_call.1} parent=75 // pred_check
          %p478 = pneg %p138
        $region82: #{tpu_custom_call.1} parent=75 // pred_check_branch
          %480 = sbr.rel (%p478) target = $region84
        $region83: #{tpu_custom_call.1} parent=75 // pred_region
          %481 = dma.done [#allocation7], 8192
        $region84: #{tpu_custom_call.1} parent=75 // pred_fallthru
          _
        // Predicated region
        $region85: #{tpu_custom_call.1} parent=75 // pred_check
          %p482 = pneg %p180
        $region86: #{tpu_custom_call.1} parent=75 // pred_check_branch
          %484 = sbr.rel (%p482) target = $region88
        $region87: #{tpu_custom_call.1} parent=75 // pred_region
          %485 = dma.done [#allocation7], 3072
        $region88: #{tpu_custom_call.1} parent=75 // pred_fallthru
          _
        %p486 = scmp.lt.s32.totalorder %s33, 3
        %s487 = scalar_select %p486, %s33, 3
        %s488 = smul.addr %s487, 8
        %s489 = scalar_lea.vmem %s0, %s488
        %p490 = pneg %p54
        %p491 = pneg %p51
        %p492 = pneg %p75
        %p493 = pneg %p72
        %p494 = pneg %p96
        %p495 = pneg %p93
        %p496 = pneg %p117
        %p497 = pneg %p114
        %p498 = pneg %p138
        %p499 = pneg %p135
        %p500 = pneg %p159
        %p501 = pneg %p156
        %p502 = pneg %p180
        %p503 = pneg %p177
        %p504 = pneg %p201
        %p505 = pneg %p198
        %p506 = pneg %p222
        %p507 = pneg %p219
        %p508 = pneg %p243
        %p509 = pneg %p240
        %p510 = pneg %p264
        %p511 = pneg %p261
        %p512 = pneg %p285
        %p513 = pneg %p282
        %p514 = pneg %p306
        %p515 = pneg %p303
        %p516 = pneg %p327
        %p517 = pneg %p324
        %p518 = pneg %p353
        %p519 = pneg %p350
        %s520 = sand.u32 %s340, 1
        %s521 = scalar_lea.sflag [#allocation5], %s520
        %s522 = sand.u32 %s340, 1
        %s523 = smul.addr %s522, 8
        %s524 = scalar_lea.vmem [#allocation9], %s523
        %p525 = pneg %p374
        %p526 = pneg %p371
        %p527 = scmp.lt.s32.totalorder %s33, 3
        %s528 = scalar_select %p527, %s33, 3
        %s529 = smul.addr %s528, 8
        %s530 = scalar_lea.vmem %s0, %s529
        %p532 = scmp.eq.s32.totalorder %s33, 0
        // Predicated region
        $region89: #{tpu_custom_call.1} parent=75 // pred_check
          %p533 = pneg %p532
        $region90: #{tpu_custom_call.1} parent=75 // pred_check_branch
          %535 = sbr.rel (%p533) target = $region92
        $region91: #{tpu_custom_call.1} parent=75 // pred_region
          %v536 = vld [vmem:[#allocation3] sm:$0xff]
          %537 = vst [vmem:[#allocation10] sm:$0xff] %v536
        $region92: #{tpu_custom_call.1} parent=75 // pred_fallthru
          _
        %v538 = vld [vmem:[%s530] sm:$0xff]
        %v539 = vld [vmem:[#allocation10] sm:$0xff]
        %v540 = vld [vmem:[%s2] sm:$0xff]
        %v541 = vld [vmem:[%s2 + $0x8] sm:$0xf]
        %v542 = vld [vmem:[%s3] sm:$0x7]
        %v544 = vlaneseq
        %v545 = vshrl.u32 %v544, 7
        %v546 = vsub.s32 0, %v545
        %v547 = vrot.slane %v542, %v546
        %v548 = vlaneseq
        %v549 = vshrl.u32 %v548, 7
        %v550 = vsub.s32 1, %v549
        %v551 = vrot.slane %v542, %v550
        %v552 = vlaneseq
        %v553 = vshrl.u32 %v552, 7
        %v554 = vsub.s32 2, %v553
        %v555 = vrot.slane %v542, %v554
        %560 = vset.pattern.permute.xlu0 0
        %561 = vperm.xlu0 %560, %v538
        %v562 = vpop.permute.xlu0 %561
        %v566 = vlaneseq
        %v567 = vshrl.u32 %v566, 7
        %v568 = vsub.s32 0, %v567
        %v569 = vrot.slane %v540, %v568
        %v570 = vlaneseq
        %v571 = vshrl.u32 %v570, 7
        %v572 = vsub.s32 4, %v571
        %v573 = vrot.slane %v540, %v572
        %v574 = vlaneseq
        %v575 = vshrl.u32 %v574, 7
        %v576 = vsub.s32 0, %v575
        %v577 = vrot.slane %v541, %v576
        %v581 = vlaneseq
        %v582 = vshrl.u32 %v581, 7
        %v583 = vsub.s32 0, %v582
        %v584 = vrot.slane %v569, %v583
        %v585 = vlaneseq
        %v586 = vshrl.u32 %v585, 7
        %v587 = vsub.s32 0, %v586
        %v588 = vrot.slane %v573, %v587
        %v589 = vlaneseq
        %v590 = vshrl.u32 %v589, 7
        %v591 = vsub.s32 0, %v590
        %v592 = vrot.slane %v577, %v591
        %v593 = vmul.f32 %v562, %v584
        %v594 = vmul.f32 %v562, %v588
        %v595 = vmul.f32 %v562, %v592
        %v596 = vadd.f32 %v547, %v593
        %v597 = vadd.f32 %v551, %v594
        %v598 = vadd.f32 %v555, %v595
        %599 = vset.pattern.permute.xlu0 1
        %600 = vperm.xlu0 %599, %v538
        %v601 = vpop.permute.xlu0 %600
        %v603 = vlaneseq
        %v604 = vshrl.u32 %v603, 7
        %v605 = vsub.s32 1, %v604
        %v606 = vrot.slane %v540, %v605
        %v607 = vlaneseq
        %v608 = vshrl.u32 %v607, 7
        %v609 = vsub.s32 5, %v608
        %v610 = vrot.slane %v540, %v609
        %v611 = vlaneseq
        %v612 = vshrl.u32 %v611, 7
        %v613 = vsub.s32 1, %v612
        %v614 = vrot.slane %v541, %v613
        %v618 = vlaneseq
        %v619 = vshrl.u32 %v618, 7
        %v620 = vsub.s32 1, %v619
        %v621 = vrot.slane %v606, %v620
        %v622 = vlaneseq
        %v623 = vshrl.u32 %v622, 7
        %v624 = vsub.s32 1, %v623
        %v625 = vrot.slane %v610, %v624
        %v626 = vlaneseq
        %v627 = vshrl.u32 %v626, 7
        %v628 = vsub.s32 1, %v627
        %v629 = vrot.slane %v614, %v628
        %v630 = vmul.f32 %v601, %v621
        %v631 = vmul.f32 %v601, %v625
        %v632 = vmul.f32 %v601, %v629
        %v633 = vadd.f32 %v596, %v630
        %v634 = vadd.f32 %v597, %v631
        %v635 = vadd.f32 %v598, %v632
        %636 = vset.pattern.permute.xlu0 2
        %637 = vperm.xlu0 %636, %v538
        %v638 = vpop.permute.xlu0 %637
        %v640 = vlaneseq
        %v641 = vshrl.u32 %v640, 7
        %v642 = vsub.s32 2, %v641
        %v643 = vrot.slane %v540, %v642
        %v644 = vlaneseq
        %v645 = vshrl.u32 %v644, 7
        %v646 = vsub.s32 6, %v645
        %v647 = vrot.slane %v540, %v646
        %v648 = vlaneseq
        %v649 = vshrl.u32 %v648, 7
        %v650 = vsub.s32 2, %v649
        %v651 = vrot.slane %v541, %v650
        %v655 = vlaneseq
        %v656 = vshrl.u32 %v655, 7
        %v657 = vsub.s32 2, %v656
        %v658 = vrot.slane %v643, %v657
        %v659 = vlaneseq
        %v660 = vshrl.u32 %v659, 7
        %v661 = vsub.s32 2, %v660
        %v662 = vrot.slane %v647, %v661
        %v663 = vlaneseq
        %v664 = vshrl.u32 %v663, 7
        %v665 = vsub.s32 2, %v664
        %v666 = vrot.slane %v651, %v665
        %v667 = vmul.f32 %v638, %v658
        %v668 = vmul.f32 %v638, %v662
        %v669 = vmul.f32 %v638, %v666
        %v670 = vadd.f32 %v633, %v667
        %v671 = vadd.f32 %v634, %v668
        %v672 = vadd.f32 %v635, %v669
        %673 = vset.pattern.permute.xlu0 3
        %674 = vperm.xlu0 %673, %v538
        %v675 = vpop.permute.xlu0 %674
        %v677 = vlaneseq
        %v678 = vshrl.u32 %v677, 7
        %v679 = vsub.s32 3, %v678
        %v680 = vrot.slane %v540, %v679
        %v681 = vlaneseq
        %v682 = vshrl.u32 %v681, 7
        %v683 = vsub.s32 7, %v682
        %v684 = vrot.slane %v540, %v683
        %v685 = vlaneseq
        %v686 = vshrl.u32 %v685, 7
        %v687 = vsub.s32 3, %v686
        %v688 = vrot.slane %v541, %v687
        %v692 = vlaneseq
        %v693 = vshrl.u32 %v692, 7
        %v694 = vsub.s32 3, %v693
        %v695 = vrot.slane %v680, %v694
        %v696 = vlaneseq
        %v697 = vshrl.u32 %v696, 7
        %v698 = vsub.s32 3, %v697
        %v699 = vrot.slane %v684, %v698
        %v700 = vlaneseq
        %v701 = vshrl.u32 %v700, 7
        %v702 = vsub.s32 3, %v701
        %v703 = vrot.slane %v688, %v702
        %v704 = vmul.f32 %v675, %v695
        %v705 = vmul.f32 %v675, %v699
        %v706 = vmul.f32 %v675, %v703
        %v707 = vadd.f32 %v670, %v704
        %v708 = vadd.f32 %v671, %v705
        %v709 = vadd.f32 %v672, %v706
        %v710 = vmax.f32 %v707, 0.0
        %v711 = vmax.f32 %v708, 0.0
        %v712 = vmax.f32 %v709, 0.0
        %v713 = vpack.c.bf16 %v710, %v710
        %v714 = vpack.c.bf16 %v711, %v711
        %v715 = vpack.c.bf16 %v712, %v712
        %v719 = vunpack.c.l.b16 %v713
        %v720 = vunpack.c.l.b16 %v714
        %v721 = vunpack.c.l.b16 %v715
        %v722 = vpack.c.b16 %v720, %v719
        %v723 = vpack.c.b16 %v721, %v721
        %726 = vst [vmem:[#allocation2] sm:$0xff] %v722
        %727 = vst [vmem:[#allocation2 + $0x8] sm:$0xf] %v723
        %v728 = vpack.c.bf16 %v539, %v539
        %729 = vst [vmem:[#allocation2 + $0xc] sm:$0xf] %v728
        %v730 = vld [vmem:[#allocation2] sm:$0xff]
        %v731 = vld [vmem:[#allocation2 + $0x8] sm:$0xff]
        %v732 = vld [vmem:[#allocation6] sm:$0xff]
        %v733 = vld [vmem:[#allocation6 + $0x8] sm:$0xff]
        %v734 = vld [vmem:[#allocation6 + $0x10] sm:$0xff]
        %v735 = vld [vmem:[#allocation6 + $0x18] sm:$0xff]
        %v736 = vld [vmem:[#allocation6 + $0x20] sm:$0xff]
        %v737 = vld [vmem:[#allocation6 + $0x28] sm:$0xff]
        %v738 = vld [vmem:[#allocation6 + $0x30] sm:$0xff]
        %v739 = vld [vmem:[#allocation6 + $0x38] sm:$0xff]
        %v740 = vld [vmem:[#allocation6 + $0x40] sm:$0xff]
        %v741 = vld [vmem:[#allocation6 + $0x48] sm:$0xff]
        %v742 = vld [vmem:[#allocation6 + $0x50] sm:$0xff]
        %v743 = vld [vmem:[#allocation6 + $0x58] sm:$0xff]
        %v744 = vld [vmem:[#allocation6 + $0x60] sm:$0xff]
        %v745 = vld [vmem:[#allocation6 + $0x68] sm:$0xff]
        %v746 = vld [vmem:[#allocation6 + $0x70] sm:$0xff]
        %v747 = vld [vmem:[#allocation6 + $0x78] sm:$0xff]
        %v748 = vld [vmem:[#allocation6 + $0x80] sm:$0xff]
        %v749 = vld [vmem:[#allocation6 + $0x88] sm:$0xff]
        %v750 = vld [vmem:[#allocation6 + $0x90] sm:$0xff]
        %v751 = vld [vmem:[#allocation6 + $0x98] sm:$0xff]
        %v752 = vld [vmem:[#allocation6 + $0xa0] sm:$0xff]
        %v753 = vld [vmem:[#allocation6 + $0xa8] sm:$0xff]
        %v754 = vld [vmem:[#allocation6 + $0xb0] sm:$0xff]
        %v755 = vld [vmem:[#allocation6 + $0xb8] sm:$0xff]
        %v756 = vld [vmem:[#allocation6 + $0xc0] sm:$0xff]
        %v757 = vld [vmem:[#allocation6 + $0xc8] sm:$0xff]
        %v758 = vld [vmem:[#allocation6 + $0xd0] sm:$0xff]
        %v759 = vld [vmem:[#allocation6 + $0xd8] sm:$0xff]
        %v760 = vld [vmem:[#allocation6 + $0xe0] sm:$0xff]
        %v761 = vld [vmem:[#allocation6 + $0xe8] sm:$0xff]
        %v762 = vld [vmem:[#allocation6 + $0xf0] sm:$0xff]
        %v763 = vld [vmem:[#allocation6 + $0xf8] sm:$0xff]
        %v764 = vld [vmem:[#allocation6 + $0x100] sm:$0xff]
        %v765 = vld [vmem:[#allocation6 + $0x108] sm:$0xff]
        %v766 = vld [vmem:[#allocation6 + $0x110] sm:$0xff]
        %v767 = vld [vmem:[#allocation6 + $0x118] sm:$0xff]
        %v768 = vld [vmem:[#allocation6 + $0x120] sm:$0xff]
        %v769 = vld [vmem:[#allocation6 + $0x128] sm:$0xff]
        %v770 = vld [vmem:[#allocation6 + $0x130] sm:$0xff]
        %v771 = vld [vmem:[#allocation6 + $0x138] sm:$0xff]
        %v772 = vld [vmem:[#allocation6 + $0x140] sm:$0xff]
        %v773 = vld [vmem:[#allocation6 + $0x148] sm:$0xff]
        %v774 = vld [vmem:[#allocation6 + $0x150] sm:$0xff]
        %v775 = vld [vmem:[#allocation6 + $0x158] sm:$0xff]
        %v776 = vld [vmem:[#allocation6 + $0x160] sm:$0xff]
        %v777 = vld [vmem:[#allocation6 + $0x168] sm:$0xff]
        %v778 = vld [vmem:[#allocation6 + $0x170] sm:$0xff]
        %v779 = vld [vmem:[#allocation6 + $0x178] sm:$0xff]
        %v780 = vld [vmem:[#allocation6 + $0x180] sm:$0xff]
        %v781 = vld [vmem:[#allocation6 + $0x188] sm:$0xff]
        %v782 = vld [vmem:[#allocation6 + $0x190] sm:$0xff]
        %v783 = vld [vmem:[#allocation6 + $0x198] sm:$0xff]
        %v784 = vld [vmem:[#allocation6 + $0x1a0] sm:$0xff]
        %v785 = vld [vmem:[#allocation6 + $0x1a8] sm:$0xff]
        %v786 = vld [vmem:[#allocation6 + $0x1b0] sm:$0xff]
        %v787 = vld [vmem:[#allocation6 + $0x1b8] sm:$0xff]
        %v788 = vld [vmem:[#allocation6 + $0x1c0] sm:$0xff]
        %v789 = vld [vmem:[#allocation6 + $0x1c8] sm:$0xff]
        %v790 = vld [vmem:[#allocation6 + $0x1d0] sm:$0xff]
        %v791 = vld [vmem:[#allocation6 + $0x1d8] sm:$0xff]
        %v792 = vld [vmem:[#allocation6 + $0x1e0] sm:$0xff]
        %v793 = vld [vmem:[#allocation6 + $0x1e8] sm:$0xff]
        %v794 = vld [vmem:[#allocation6 + $0x1f0] sm:$0xff]
        %v795 = vld [vmem:[#allocation6 + $0x1f8] sm:$0xff]
        %v796 = vld [vmem:[%s5] sm:$0x3]
        %v798 = vlaneseq
        %v799 = vshrl.u32 %v798, 7
        %v800 = vsub.s32 0, %v799
        %v801 = vrot.slane %v796, %v800
        %v802 = vlaneseq
        %v803 = vshrl.u32 %v802, 7
        %v804 = vsub.s32 1, %v803
        %v805 = vrot.slane %v796, %v804
        %v810 = vunpack.c.l.b16 %v730
        %v811 = vunpack.c.h.b16 %v730
        %v812 = vunpack.c.l.b16 %v731
        %v813 = vunpack.c.h.b16 %v731
        %v814 = vpack.c.b16 %v810, %v810
        %v815 = vpack.c.b16 %v811, %v811
        %v816 = vpack.c.b16 %v812, %v812
        %v817 = vpack.c.b16 %v813, %v813
        %v886 = vunpack.c.l.b16 %v732
        %v887 = vunpack.c.h.b16 %v732
        %v888 = vunpack.c.l.b16 %v733
        %v889 = vunpack.c.h.b16 %v733
        %v890 = vunpack.c.l.b16 %v734
        %v891 = vunpack.c.h.b16 %v734
        %v892 = vunpack.c.l.b16 %v735
        %v893 = vunpack.c.h.b16 %v735
        %v894 = vunpack.c.l.b16 %v736
        %v895 = vunpack.c.h.b16 %v736
        %v896 = vunpack.c.l.b16 %v737
        %v897 = vunpack.c.h.b16 %v737
        %v898 = vunpack.c.l.b16 %v738
        %v899 = vunpack.c.h.b16 %v738
        %v900 = vunpack.c.l.b16 %v739
        %v901 = vunpack.c.h.b16 %v739
        %v902 = vunpack.c.l.b16 %v740
        %v903 = vunpack.c.h.b16 %v740
        %v904 = vunpack.c.l.b16 %v741
        %v905 = vunpack.c.h.b16 %v741
        %v906 = vunpack.c.l.b16 %v742
        %v907 = vunpack.c.h.b16 %v742
        %v908 = vunpack.c.l.b16 %v743
        %v909 = vunpack.c.h.b16 %v743
        %v910 = vunpack.c.l.b16 %v744
        %v911 = vunpack.c.h.b16 %v744
        %v912 = vunpack.c.l.b16 %v745
        %v913 = vunpack.c.h.b16 %v745
        %v914 = vunpack.c.l.b16 %v746
        %v915 = vunpack.c.h.b16 %v746
        %v916 = vunpack.c.l.b16 %v747
        %v917 = vunpack.c.h.b16 %v747
        %v918 = vunpack.c.l.b16 %v748
        %v919 = vunpack.c.h.b16 %v748
        %v920 = vunpack.c.l.b16 %v749
        %v921 = vunpack.c.h.b16 %v749
        %v922 = vunpack.c.l.b16 %v750
        %v923 = vunpack.c.h.b16 %v750
        %v924 = vunpack.c.l.b16 %v751
        %v925 = vunpack.c.h.b16 %v751
        %v926 = vunpack.c.l.b16 %v752
        %v927 = vunpack.c.h.b16 %v752
        %v928 = vunpack.c.l.b16 %v753
        %v929 = vunpack.c.h.b16 %v753
        %v930 = vunpack.c.l.b16 %v754
        %v931 = vunpack.c.h.b16 %v754
        %v932 = vunpack.c.l.b16 %v755
        %v933 = vunpack.c.h.b16 %v755
        %v934 = vunpack.c.l.b16 %v756
        %v935 = vunpack.c.h.b16 %v756
        %v936 = vunpack.c.l.b16 %v757
        %v937 = vunpack.c.h.b16 %v757
        %v938 = vunpack.c.l.b16 %v758
        %v939 = vunpack.c.h.b16 %v758
        %v940 = vunpack.c.l.b16 %v759
        %v941 = vunpack.c.h.b16 %v759
        %v942 = vunpack.c.l.b16 %v760
        %v943 = vunpack.c.h.b16 %v760
        %v944 = vunpack.c.l.b16 %v761
        %v945 = vunpack.c.h.b16 %v761
        %v946 = vunpack.c.l.b16 %v762
        %v947 = vunpack.c.h.b16 %v762
        %v948 = vunpack.c.l.b16 %v763
        %v949 = vunpack.c.h.b16 %v763
        %v950 = vunpack.c.l.b16 %v764
        %v951 = vunpack.c.h.b16 %v764
        %v952 = vunpack.c.l.b16 %v765
        %v953 = vunpack.c.h.b16 %v765
        %v954 = vunpack.c.l.b16 %v766
        %v955 = vunpack.c.h.b16 %v766
        %v956 = vunpack.c.l.b16 %v767
        %v957 = vunpack.c.h.b16 %v767
        %v958 = vunpack.c.l.b16 %v768
        %v959 = vunpack.c.h.b16 %v768
        %v960 = vunpack.c.l.b16 %v769
        %v961 = vunpack.c.h.b16 %v769
        %v962 = vunpack.c.l.b16 %v770
        %v963 = vunpack.c.h.b16 %v770
        %v964 = vunpack.c.l.b16 %v771
        %v965 = vunpack.c.h.b16 %v771
        %v966 = vunpack.c.l.b16 %v772
        %v967 = vunpack.c.h.b16 %v772
        %v968 = vunpack.c.l.b16 %v773
        %v969 = vunpack.c.h.b16 %v773
        %v970 = vunpack.c.l.b16 %v774
        %v971 = vunpack.c.h.b16 %v774
        %v972 = vunpack.c.l.b16 %v775
        %v973 = vunpack.c.h.b16 %v775
        %v974 = vunpack.c.l.b16 %v776
        %v975 = vunpack.c.h.b16 %v776
        %v976 = vunpack.c.l.b16 %v777
        %v977 = vunpack.c.h.b16 %v777
        %v978 = vunpack.c.l.b16 %v778
        %v979 = vunpack.c.h.b16 %v778
        %v980 = vunpack.c.l.b16 %v779
        %v981 = vunpack.c.h.b16 %v779
        %v982 = vunpack.c.l.b16 %v780
        %v983 = vunpack.c.h.b16 %v780
        %v984 = vunpack.c.l.b16 %v781
        %v985 = vunpack.c.h.b16 %v781
        %v986 = vunpack.c.l.b16 %v782
        %v987 = vunpack.c.h.b16 %v782
        %v988 = vunpack.c.l.b16 %v783
        %v989 = vunpack.c.h.b16 %v783
        %v990 = vunpack.c.l.b16 %v784
        %v991 = vunpack.c.h.b16 %v784
        %v992 = vunpack.c.l.b16 %v785
        %v993 = vunpack.c.h.b16 %v785
        %v994 = vunpack.c.l.b16 %v786
        %v995 = vunpack.c.h.b16 %v786
        %v996 = vunpack.c.l.b16 %v787
        %v997 = vunpack.c.h.b16 %v787
        %v998 = vunpack.c.l.b16 %v788
        %v999 = vunpack.c.h.b16 %v788
        %v1000 = vunpack.c.l.b16 %v789
        %v1001 = vunpack.c.h.b16 %v789
        %v1002 = vunpack.c.l.b16 %v790
        %v1003 = vunpack.c.h.b16 %v790
        %v1004 = vunpack.c.l.b16 %v791
        %v1005 = vunpack.c.h.b16 %v791
        %v1006 = vunpack.c.l.b16 %v792
        %v1007 = vunpack.c.h.b16 %v792
        %v1008 = vunpack.c.l.b16 %v793
        %v1009 = vunpack.c.h.b16 %v793
        %v1010 = vunpack.c.l.b16 %v794
        %v1011 = vunpack.c.h.b16 %v794
        %v1012 = vunpack.c.l.b16 %v795
        %v1013 = vunpack.c.h.b16 %v795
        %v1014 = vpack.c.b16 %v888, %v886
        %v1015 = vpack.c.b16 %v889, %v887
        %v1016 = vpack.c.b16 %v892, %v890
        %v1017 = vpack.c.b16 %v893, %v891
        %v1018 = vpack.c.b16 %v896, %v894
        %v1019 = vpack.c.b16 %v897, %v895
        %v1020 = vpack.c.b16 %v900, %v898
        %v1021 = vpack.c.b16 %v901, %v899
        %v1022 = vpack.c.b16 %v904, %v902
        %v1023 = vpack.c.b16 %v905, %v903
        %v1024 = vpack.c.b16 %v908, %v906
        %v1025 = vpack.c.b16 %v909, %v907
        %v1026 = vpack.c.b16 %v912, %v910
        %v1027 = vpack.c.b16 %v913, %v911
        %v1028 = vpack.c.b16 %v916, %v914
        %v1029 = vpack.c.b16 %v917, %v915
        %v1030 = vpack.c.b16 %v920, %v918
        %v1031 = vpack.c.b16 %v921, %v919
        %v1032 = vpack.c.b16 %v924, %v922
        %v1033 = vpack.c.b16 %v925, %v923
        %v1034 = vpack.c.b16 %v928, %v926
        %v1035 = vpack.c.b16 %v929, %v927
        %v1036 = vpack.c.b16 %v932, %v930
        %v1037 = vpack.c.b16 %v933, %v931
        %v1038 = vpack.c.b16 %v936, %v934
        %v1039 = vpack.c.b16 %v937, %v935
        %v1040 = vpack.c.b16 %v940, %v938
        %v1041 = vpack.c.b16 %v941, %v939
        %v1042 = vpack.c.b16 %v944, %v942
        %v1043 = vpack.c.b16 %v945, %v943
        %v1044 = vpack.c.b16 %v948, %v946
        %v1045 = vpack.c.b16 %v949, %v947
        %v1046 = vpack.c.b16 %v952, %v950
        %v1047 = vpack.c.b16 %v953, %v951
        %v1048 = vpack.c.b16 %v956, %v954
        %v1049 = vpack.c.b16 %v957, %v955
        %v1050 = vpack.c.b16 %v960, %v958
        %v1051 = vpack.c.b16 %v961, %v959
        %v1052 = vpack.c.b16 %v964, %v962
        %v1053 = vpack.c.b16 %v965, %v963
        %v1054 = vpack.c.b16 %v968, %v966
        %v1055 = vpack.c.b16 %v969, %v967
        %v1056 = vpack.c.b16 %v972, %v970
        %v1057 = vpack.c.b16 %v973, %v971
        %v1058 = vpack.c.b16 %v976, %v974
        %v1059 = vpack.c.b16 %v977, %v975
        %v1060 = vpack.c.b16 %v980, %v978
        %v1061 = vpack.c.b16 %v981, %v979
        %v1062 = vpack.c.b16 %v984, %v982
        %v1063 = vpack.c.b16 %v985, %v983
        %v1064 = vpack.c.b16 %v988, %v986
        %v1065 = vpack.c.b16 %v989, %v987
        %v1066 = vpack.c.b16 %v992, %v990
        %v1067 = vpack.c.b16 %v993, %v991
        %v1068 = vpack.c.b16 %v996, %v994
        %v1069 = vpack.c.b16 %v997, %v995
        %v1070 = vpack.c.b16 %v1000, %v998
        %v1071 = vpack.c.b16 %v1001, %v999
        %v1072 = vpack.c.b16 %v1004, %v1002
        %v1073 = vpack.c.b16 %v1005, %v1003
        %v1074 = vpack.c.b16 %v1008, %v1006
        %v1075 = vpack.c.b16 %v1009, %v1007
        %v1076 = vpack.c.b16 %v1012, %v1010
        %v1077 = vpack.c.b16 %v1013, %v1011
        %1142 = vmatprep.subr.bf16.mxu0 %v1029
        %1143 = vmatpush1.bf16.msra.mxu0 %v1028
        %1144 = vmatprep.subr.bf16.mxu0 %v1027
        %1145 = vmatpush1.bf16.msra.mxu0 %v1026
        %1146 = vmatprep.subr.bf16.mxu0 %v1025
        %1147 = vmatpush1.bf16.msra.mxu0 %v1024
        %1148 = vmatprep.subr.bf16.mxu0 %v1023
        %1149 = vmatpush1.bf16.msra.mxu0 %v1022
        %1150 = vmatprep.subr.bf16.mxu0 %v1021
        %1151 = vmatpush1.bf16.msra.mxu0 %v1020
        %1152 = vmatprep.subr.bf16.mxu0 %v1019
        %1153 = vmatpush1.bf16.msra.mxu0 %v1018
        %1154 = vmatprep.subr.bf16.mxu0 %v1017
        %1155 = vmatpush1.bf16.msra.mxu0 %v1016
        %1156 = vmatprep.subr.bf16.mxu0 %v1015
        %1157 = vmatpush1.bf16.msra.mxu0 %v1014
        %1158 = vmatprep.subr.bf16.mxu0 %v1045
        %1159 = vmatpush2.bf16.msra.mxu0 %v1044
        %1160 = vmatprep.subr.bf16.mxu0 %v1043
        %1161 = vmatpush2.bf16.msra.mxu0 %v1042
        %1162 = vmatprep.subr.bf16.mxu0 %v1041
        %1163 = vmatpush2.bf16.msra.mxu0 %v1040
        %1164 = vmatprep.subr.bf16.mxu0 %v1039
        %1165 = vmatpush2.bf16.msra.mxu0 %v1038
        %1166 = vmatprep.subr.bf16.mxu0 %v1037
        %1167 = vmatpush2.bf16.msra.mxu0 %v1036
        %1168 = vmatprep.subr.bf16.mxu0 %v1035
        %1169 = vmatpush2.bf16.msra.mxu0 %v1034
        %1170 = vmatprep.subr.bf16.mxu0 %v1033
        %1171 = vmatpush2.bf16.msra.mxu0 %v1032
        %1172 = vmatprep.subr.bf16.mxu0 %v1031
        %1173 = vmatpush2.bf16.msra.mxu0 %v1030
        %1174 = vmatprep.mubr.bf16.mxu0 %v815
        %1175 = vmatmul.mubr.bf16.gmra.mxu0 %v814
        %v1176 = vpop.f32.mrf.mxu0
        %v1177 = vadd.f32 %v801, %v1176
        %v1178 = vpop.f32.mrf.mxu0
        %v1179 = vadd.f32 %v805, %v1178
        %v1180 = vpop.f32.mrf.mxu0
        %v1181 = vpop.f32.mrf.mxu0
        %1182 = vdwg.mxu0
        %1183 = vmatprep.subr.bf16.mxu0 %v1061
        %1184 = vmatpush1.bf16.msra.mxu0 %v1060
        %1185 = vmatprep.subr.bf16.mxu0 %v1059
        %1186 = vmatpush1.bf16.msra.mxu0 %v1058
        %1187 = vmatprep.subr.bf16.mxu0 %v1057
        %1188 = vmatpush1.bf16.msra.mxu0 %v1056
        %1189 = vmatprep.subr.bf16.mxu0 %v1055
        %1190 = vmatpush1.bf16.msra.mxu0 %v1054
        %1191 = vmatprep.subr.bf16.mxu0 %v1053
        %1192 = vmatpush1.bf16.msra.mxu0 %v1052
        %1193 = vmatprep.subr.bf16.mxu0 %v1051
        %1194 = vmatpush1.bf16.msra.mxu0 %v1050
        %1195 = vmatprep.subr.bf16.mxu0 %v1049
        %1196 = vmatpush1.bf16.msra.mxu0 %v1048
        %1197 = vmatprep.subr.bf16.mxu0 %v1047
        %1198 = vmatpush1.bf16.msra.mxu0 %v1046
        %1199 = vmatprep.subr.bf16.mxu0 %v1077
        %1200 = vmatpush2.bf16.msra.mxu0 %v1076
        %1201 = vmatprep.subr.bf16.mxu0 %v1075
        %1202 = vmatpush2.bf16.msra.mxu0 %v1074
        %1203 = vmatprep.subr.bf16.mxu0 %v1073
        %1204 = vmatpush2.bf16.msra.mxu0 %v1072
        %1205 = vmatprep.subr.bf16.mxu0 %v1071
        %1206 = vmatpush2.bf16.msra.mxu0 %v1070
        %1207 = vmatprep.subr.bf16.mxu0 %v1069
        %1208 = vmatpush2.bf16.msra.mxu0 %v1068
        %1209 = vmatprep.subr.bf16.mxu0 %v1067
        %1210 = vmatpush2.bf16.msra.mxu0 %v1066
        %1211 = vmatprep.subr.bf16.mxu0 %v1065
        %1212 = vmatpush2.bf16.msra.mxu0 %v1064
        %1213 = vmatprep.subr.bf16.mxu0 %v1063
        %1214 = vmatpush2.bf16.msra.mxu0 %v1062
        %1215 = vmatprep.mubr.bf16.mxu0 %v817
        %1216 = vmatmul.mubr.bf16.gmra.mxu0 %v816
        %v1217 = vpop.f32.mrf.mxu0
        %v1218 = vadd.f32 %v1177, %v1217
        %v1219 = vpop.f32.mrf.mxu0
        %v1220 = vadd.f32 %v1179, %v1219
        %v1221 = vpop.f32.mrf.mxu0
        %v1222 = vpop.f32.mrf.mxu0
        %1223 = vdwg.mxu0
        %v1224 = vxor.u32 %v1218, 2147483648
        %v1225 = vmul.f32 %v1224, 1.442695
        %v1226 = vpow.pop %v1225
        %v1227 = vadd.f32 %v1226, 1.0
        %v1228 = vrcp.pop %v1227
        %v1229 = vmul.f32 1.0, %v1228
        %v1230 = vxor.u32 %v1220, 2147483648
        %v1231 = vmul.f32 %v1230, 1.442695
        %v1232 = vpow.pop %v1231
        %v1233 = vadd.f32 %v1232, 1.0
        %v1234 = vrcp.pop %v1233
        %v1235 = vmul.f32 1.0, %v1234
        %v1236 = vld [vmem:[#allocation8] sm:$0xf]
        %v1237 = vld [vmem:[#allocation8 + $0x4] sm:$0xf]
        %v1238 = vld [vmem:[#allocation8 + $0x8] sm:$0xf]
        %v1239 = vld [vmem:[#allocation8 + $0xc] sm:$0xf]
        %v1240 = vld [vmem:[#allocation8 + $0x10] sm:$0xf]
        %v1241 = vld [vmem:[#allocation8 + $0x14] sm:$0xf]
        %v1242 = vld [vmem:[#allocation8 + $0x18] sm:$0xf]
        %v1243 = vld [vmem:[#allocation8 + $0x1c] sm:$0xf]
        %v1244 = vld [vmem:[#allocation8 + $0x20] sm:$0xf]
        %v1245 = vld [vmem:[#allocation8 + $0x24] sm:$0xf]
        %v1246 = vld [vmem:[#allocation8 + $0x28] sm:$0xf]
        %v1247 = vld [vmem:[#allocation8 + $0x2c] sm:$0xf]
        %v1248 = vld [vmem:[#allocation8 + $0x30] sm:$0xf]
        %v1249 = vld [vmem:[#allocation8 + $0x34] sm:$0xf]
        %v1250 = vld [vmem:[#allocation8 + $0x38] sm:$0xf]
        %v1251 = vld [vmem:[#allocation8 + $0x3c] sm:$0xf]
        %v1252 = vld [vmem:[#allocation8 + $0x40] sm:$0xf]
        %v1253 = vld [vmem:[#allocation8 + $0x44] sm:$0xf]
        %v1254 = vld [vmem:[#allocation8 + $0x48] sm:$0xf]
        %v1255 = vld [vmem:[#allocation8 + $0x4c] sm:$0xf]
        %v1256 = vld [vmem:[#allocation8 + $0x50] sm:$0xf]
        %v1257 = vld [vmem:[#allocation8 + $0x54] sm:$0xf]
        %v1258 = vld [vmem:[#allocation8 + $0x58] sm:$0xf]
        %v1259 = vld [vmem:[#allocation8 + $0x5c] sm:$0xf]
        %v1260 = vld [vmem:[#allocation8 + $0x60] sm:$0xf]
        %v1261 = vld [vmem:[#allocation8 + $0x64] sm:$0xf]
        %v1262 = vld [vmem:[#allocation8 + $0x68] sm:$0xf]
        %v1263 = vld [vmem:[#allocation8 + $0x6c] sm:$0xf]
        %v1264 = vld [vmem:[#allocation8 + $0x70] sm:$0xf]
        %v1265 = vld [vmem:[#allocation8 + $0x74] sm:$0xf]
        %v1266 = vld [vmem:[#allocation8 + $0x78] sm:$0xf]
        %v1267 = vld [vmem:[#allocation8 + $0x7c] sm:$0xf]
        %v1268 = vld [vmem:[#allocation8 + $0x80] sm:$0xf]
        %v1269 = vld [vmem:[#allocation8 + $0x84] sm:$0xf]
        %v1270 = vld [vmem:[#allocation8 + $0x88] sm:$0xf]
        %v1271 = vld [vmem:[#allocation8 + $0x8c] sm:$0xf]
        %v1272 = vld [vmem:[#allocation8 + $0x90] sm:$0xf]
        %v1273 = vld [vmem:[#allocation8 + $0x94] sm:$0xf]
        %v1274 = vld [vmem:[#allocation8 + $0x98] sm:$0xf]
        %v1275 = vld [vmem:[#allocation8 + $0x9c] sm:$0xf]
        %v1276 = vld [vmem:[#allocation8 + $0xa0] sm:$0xf]
        %v1277 = vld [vmem:[#allocation8 + $0xa4] sm:$0xf]
        %v1278 = vld [vmem:[#allocation8 + $0xa8] sm:$0xf]
        %v1279 = vld [vmem:[#allocation8 + $0xac] sm:$0xf]
        %v1280 = vld [vmem:[#allocation8 + $0xb0] sm:$0xf]
        %v1281 = vld [vmem:[#allocation8 + $0xb4] sm:$0xf]
        %v1282 = vld [vmem:[#allocation8 + $0xb8] sm:$0xf]
        %v1283 = vld [vmem:[#allocation8 + $0xbc] sm:$0xf]
        %v1284 = vld [vmem:[%s7] sm:$0x1]
        %v1286 = vlaneseq
        %v1287 = vshrl.u32 %v1286, 7
        %v1288 = vsub.s32 0, %v1287
        %v1289 = vrot.slane %v1284, %v1288
        %v1339 = vunpack.c.l.b16 %v1236
        %v1340 = vunpack.c.l.b16 %v1237
        %v1341 = vunpack.c.l.b16 %v1238
        %v1342 = vunpack.c.l.b16 %v1239
        %v1343 = vunpack.c.l.b16 %v1240
        %v1344 = vunpack.c.l.b16 %v1241
        %v1345 = vunpack.c.l.b16 %v1242
        %v1346 = vunpack.c.l.b16 %v1243
        %v1347 = vunpack.c.l.b16 %v1244
        %v1348 = vunpack.c.l.b16 %v1245
        %v1349 = vunpack.c.l.b16 %v1246
        %v1350 = vunpack.c.l.b16 %v1247
        %v1351 = vunpack.c.l.b16 %v1248
        %v1352 = vunpack.c.l.b16 %v1249
        %v1353 = vunpack.c.l.b16 %v1250
        %v1354 = vunpack.c.l.b16 %v1251
        %v1355 = vunpack.c.l.b16 %v1252
        %v1356 = vunpack.c.l.b16 %v1253
        %v1357 = vunpack.c.l.b16 %v1254
        %v1358 = vunpack.c.l.b16 %v1255
        %v1359 = vunpack.c.l.b16 %v1256
        %v1360 = vunpack.c.l.b16 %v1257
        %v1361 = vunpack.c.l.b16 %v1258
        %v1362 = vunpack.c.l.b16 %v1259
        %v1363 = vunpack.c.l.b16 %v1260
        %v1364 = vunpack.c.l.b16 %v1261
        %v1365 = vunpack.c.l.b16 %v1262
        %v1366 = vunpack.c.l.b16 %v1263
        %v1367 = vunpack.c.l.b16 %v1264
        %v1368 = vunpack.c.l.b16 %v1265
        %v1369 = vunpack.c.l.b16 %v1266
        %v1370 = vunpack.c.l.b16 %v1267
        %v1371 = vunpack.c.l.b16 %v1268
        %v1372 = vunpack.c.l.b16 %v1269
        %v1373 = vunpack.c.l.b16 %v1270
        %v1374 = vunpack.c.l.b16 %v1271
        %v1375 = vunpack.c.l.b16 %v1272
        %v1376 = vunpack.c.l.b16 %v1273
        %v1377 = vunpack.c.l.b16 %v1274
        %v1378 = vunpack.c.l.b16 %v1275
        %v1379 = vunpack.c.l.b16 %v1276
        %v1380 = vunpack.c.l.b16 %v1277
        %v1381 = vunpack.c.l.b16 %v1278
        %v1382 = vunpack.c.l.b16 %v1279
        %v1383 = vunpack.c.l.b16 %v1280
        %v1384 = vunpack.c.l.b16 %v1281
        %v1385 = vunpack.c.l.b16 %v1282
        %v1386 = vunpack.c.l.b16 %v1283
        %v1387 = vpack.c.b16 %v1340, %v1339
        %v1388 = vpack.c.b16 %v1342, %v1341
        %v1389 = vpack.c.b16 %v1344, %v1343
        %v1390 = vpack.c.b16 %v1346, %v1345
        %v1391 = vpack.c.b16 %v1348, %v1347
        %v1392 = vpack.c.b16 %v1350, %v1349
        %v1393 = vpack.c.b16 %v1352, %v1351
        %v1394 = vpack.c.b16 %v1354, %v1353
        %v1395 = vpack.c.b16 %v1356, %v1355
        %v1396 = vpack.c.b16 %v1358, %v1357
        %v1397 = vpack.c.b16 %v1360, %v1359
        %v1398 = vpack.c.b16 %v1362, %v1361
        %v1399 = vpack.c.b16 %v1364, %v1363
        %v1400 = vpack.c.b16 %v1366, %v1365
        %v1401 = vpack.c.b16 %v1368, %v1367
        %v1402 = vpack.c.b16 %v1370, %v1369
        %v1403 = vpack.c.b16 %v1372, %v1371
        %v1404 = vpack.c.b16 %v1374, %v1373
        %v1405 = vpack.c.b16 %v1376, %v1375
        %v1406 = vpack.c.b16 %v1378, %v1377
        %v1407 = vpack.c.b16 %v1380, %v1379
        %v1408 = vpack.c.b16 %v1382, %v1381
        %v1409 = vpack.c.b16 %v1384, %v1383
        %v1410 = vpack.c.b16 %v1386, %v1385
        %1435 = vmatprep.subr.bf16.mxu0 0
        %1436 = vmatpush1.bf16.msra.mxu0 %v1394
        %1437 = vmatprep.subr.bf16.mxu0 0
        %1438 = vmatpush1.bf16.msra.mxu0 %v1393
        %1439 = vmatprep.subr.bf16.mxu0 0
        %1440 = vmatpush1.bf16.msra.mxu0 %v1392
        %1441 = vmatprep.subr.bf16.mxu0 0
        %1442 = vmatpush1.bf16.msra.mxu0 %v1391
        %1443 = vmatprep.subr.bf16.mxu0 0
        %1444 = vmatpush1.bf16.msra.mxu0 %v1390
        %1445 = vmatprep.subr.bf16.mxu0 0
        %1446 = vmatpush1.bf16.msra.mxu0 %v1389
        %1447 = vmatprep.subr.bf16.mxu0 0
        %1448 = vmatpush1.bf16.msra.mxu0 %v1388
        %1449 = vmatprep.subr.bf16.mxu0 0
        %1450 = vmatpush1.bf16.msra.mxu0 %v1387
        %1451 = vmatprep.subr.bf16.mxu0 0
        %1452 = vmatpush2.bf16.msra.mxu0 %v1402
        %1453 = vmatprep.subr.bf16.mxu0 0
        %1454 = vmatpush2.bf16.msra.mxu0 %v1401
        %1455 = vmatprep.subr.bf16.mxu0 0
        %1456 = vmatpush2.bf16.msra.mxu0 %v1400
        %1457 = vmatprep.subr.bf16.mxu0 0
        %1458 = vmatpush2.bf16.msra.mxu0 %v1399
        %1459 = vmatprep.subr.bf16.mxu0 0
        %1460 = vmatpush2.bf16.msra.mxu0 %v1398
        %1461 = vmatprep.subr.bf16.mxu0 0
        %1462 = vmatpush2.bf16.msra.mxu0 %v1397
        %1463 = vmatprep.subr.bf16.mxu0 0
        %1464 = vmatpush2.bf16.msra.mxu0 %v1396
        %1465 = vmatprep.subr.bf16.mxu0 0
        %1466 = vmatpush2.bf16.msra.mxu0 %v1395
        %1467 = vmatprep.mubr.bf16.mxu0 %v714
        %1468 = vmatmul.mubr.bf16.gmra.mxu0 %v713
        %v1469 = vpop.f32.mrf.mxu0
        %v1470 = vadd.f32 %v1289, %v1469
        %v1471 = vpop.f32.mrf.mxu0
        %v1472 = vpop.f32.mrf.mxu0
        %v1473 = vpop.f32.mrf.mxu0
        %1474 = vdwg.mxu0
        %1475 = vmatprep.subr.bf16.mxu0 0
        %1476 = vmatpush1.bf16.msra.mxu0 %v1410
        %1477 = vmatprep.subr.bf16.mxu0 0
        %1478 = vmatpush1.bf16.msra.mxu0 %v1409
        %1479 = vmatprep.subr.bf16.mxu0 0
        %1480 = vmatpush1.bf16.msra.mxu0 %v1408
        %1481 = vmatprep.subr.bf16.mxu0 0
        %1482 = vmatpush1.bf16.msra.mxu0 %v1407
        %1483 = vmatprep.subr.bf16.mxu0 0
        %1484 = vmatpush1.bf16.msra.mxu0 %v1406
        %1485 = vmatprep.subr.bf16.mxu0 0
        %1486 = vmatpush1.bf16.msra.mxu0 %v1405
        %1487 = vmatprep.subr.bf16.mxu0 0
        %1488 = vmatpush1.bf16.msra.mxu0 %v1404
        %1489 = vmatprep.subr.bf16.mxu0 0
        %1490 = vmatpush1.bf16.msra.mxu0 %v1403
        %1491 = vmatprep.subr.bf16.mxu0 0
        %1492 = vmatpush2.bf16.msra.mxu0 0
        %1493 = vmatprep.subr.bf16.mxu0 0
        %1494 = vmatpush2.bf16.msra.mxu0 0
        %1495 = vmatprep.subr.bf16.mxu0 0
        %1496 = vmatpush2.bf16.msra.mxu0 0
        %1497 = vmatprep.subr.bf16.mxu0 0
        %1498 = vmatpush2.bf16.msra.mxu0 0
        %1499 = vmatprep.subr.bf16.mxu0 0
        %1500 = vmatpush2.bf16.msra.mxu0 0
        %1501 = vmatprep.subr.bf16.mxu0 0
        %1502 = vmatpush2.bf16.msra.mxu0 0
        %1503 = vmatprep.subr.bf16.mxu0 0
        %1504 = vmatpush2.bf16.msra.mxu0 0
        %1505 = vmatprep.subr.bf16.mxu0 0
        %1506 = vmatpush2.bf16.msra.mxu0 0
        %1507 = vmatprep.mubr.bf16.mxu0 0
        %1508 = vmatmul.mubr.bf16.gmra.mxu0 %v715
        %v1509 = vpop.f32.mrf.mxu0
        %v1510 = vadd.f32 %v1470, %v1509
        %v1511 = vpop.f32.mrf.mxu0
        %v1512 = vpop.f32.mrf.mxu0
        %v1513 = vpop.f32.mrf.mxu0
        %1514 = vdwg.mxu0
        %v1515 = vld [vmem:[%s8] sm:$0xf]
        %v1516 = vld [vmem:[%s8 + $0x4] sm:$0xf]
        %v1517 = vld [vmem:[%s8 + $0x8] sm:$0xf]
        %v1518 = vld [vmem:[%s8 + $0xc] sm:$0xf]
        %v1519 = vld [vmem:[%s8 + $0x10] sm:$0xf]
        %v1520 = vld [vmem:[%s8 + $0x14] sm:$0xf]
        %v1521 = vld [vmem:[%s8 + $0x18] sm:$0xf]
        %v1522 = vld [vmem:[%s8 + $0x1c] sm:$0xf]
        %v1523 = vld [vmem:[%s8 + $0x20] sm:$0xf]
        %v1524 = vld [vmem:[%s8 + $0x24] sm:$0xf]
        %v1525 = vld [vmem:[%s8 + $0x28] sm:$0xf]
        %v1526 = vld [vmem:[%s8 + $0x2c] sm:$0xf]
        %v1527 = vld [vmem:[%s8 + $0x30] sm:$0xf]
        %v1528 = vld [vmem:[%s8 + $0x34] sm:$0xf]
        %v1529 = vld [vmem:[%s8 + $0x38] sm:$0xf]
        %v1530 = vld [vmem:[%s8 + $0x3c] sm:$0xf]
        %v1531 = vld [vmem:[%s9] sm:$0x1]
        %v1533 = vlaneseq
        %v1534 = vshrl.u32 %v1533, 7
        %v1535 = vsub.s32 0, %v1534
        %v1536 = vrot.slane %v1531, %v1535
        %v1554 = vunpack.c.l.b16 %v1515
        %v1555 = vunpack.c.l.b16 %v1516
        %v1556 = vunpack.c.l.b16 %v1517
        %v1557 = vunpack.c.l.b16 %v1518
        %v1558 = vunpack.c.l.b16 %v1519
        %v1559 = vunpack.c.l.b16 %v1520
        %v1560 = vunpack.c.l.b16 %v1521
        %v1561 = vunpack.c.l.b16 %v1522
        %v1562 = vunpack.c.l.b16 %v1523
        %v1563 = vunpack.c.l.b16 %v1524
        %v1564 = vunpack.c.l.b16 %v1525
        %v1565 = vunpack.c.l.b16 %v1526
        %v1566 = vunpack.c.l.b16 %v1527
        %v1567 = vunpack.c.l.b16 %v1528
        %v1568 = vunpack.c.l.b16 %v1529
        %v1569 = vunpack.c.l.b16 %v1530
        %v1570 = vpack.c.b16 %v1555, %v1554
        %v1571 = vpack.c.b16 %v1557, %v1556
        %v1572 = vpack.c.b16 %v1559, %v1558
        %v1573 = vpack.c.b16 %v1561, %v1560
        %v1574 = vpack.c.b16 %v1563, %v1562
        %v1575 = vpack.c.b16 %v1565, %v1564
        %v1576 = vpack.c.b16 %v1567, %v1566
        %v1577 = vpack.c.b16 %v1569, %v1568
        %1586 = vmatprep.subr.bf16.mxu0 0
        %1587 = vmatpush1.bf16.msra.mxu0 %v1577
        %1588 = vmatprep.subr.bf16.mxu0 0
        %1589 = vmatpush1.bf16.msra.mxu0 %v1576
        %1590 = vmatprep.subr.bf16.mxu0 0
        %1591 = vmatpush1.bf16.msra.mxu0 %v1575
        %1592 = vmatprep.subr.bf16.mxu0 0
        %1593 = vmatpush1.bf16.msra.mxu0 %v1574
        %1594 = vmatprep.subr.bf16.mxu0 0
        %1595 = vmatpush1.bf16.msra.mxu0 %v1573
        %1596 = vmatprep.subr.bf16.mxu0 0
        %1597 = vmatpush1.bf16.msra.mxu0 %v1572
        %1598 = vmatprep.subr.bf16.mxu0 0
        %1599 = vmatpush1.bf16.msra.mxu0 %v1571
        %1600 = vmatprep.subr.bf16.mxu0 0
        %1601 = vmatpush1.bf16.msra.mxu0 %v1570
        %1602 = vmatprep.subr.bf16.mxu0 0
        %1603 = vmatpush2.bf16.msra.mxu0 0
        %1604 = vmatprep.subr.bf16.mxu0 0
        %1605 = vmatpush2.bf16.msra.mxu0 0
        %1606 = vmatprep.subr.bf16.mxu0 0
        %1607 = vmatpush2.bf16.msra.mxu0 0
        %1608 = vmatprep.subr.bf16.mxu0 0
        %1609 = vmatpush2.bf16.msra.mxu0 0
        %1610 = vmatprep.subr.bf16.mxu0 0
        %1611 = vmatpush2.bf16.msra.mxu0 0
        %1612 = vmatprep.subr.bf16.mxu0 0
        %1613 = vmatpush2.bf16.msra.mxu0 0
        %1614 = vmatprep.subr.bf16.mxu0 0
        %1615 = vmatpush2.bf16.msra.mxu0 0
        %1616 = vmatprep.subr.bf16.mxu0 0
        %1617 = vmatpush2.bf16.msra.mxu0 0
        %1618 = vmatprep.mubr.bf16.mxu0 0
        %1619 = vmatmul.mubr.bf16.gmra.mxu0 %v728
        %v1620 = vpop.f32.mrf.mxu0
        %v1621 = vadd.f32 %v1536, %v1620
        %v1622 = vpop.f32.mrf.mxu0
        %v1623 = vpop.f32.mrf.mxu0
        %v1624 = vpop.f32.mrf.mxu0
        %1625 = vdwg.mxu0
        %v1626 = vmul.f32 %v1229, %v1621
        %v1627 = vadd.f32 %v1510, %v1626
        %v1628 = vtanh.pop %v1627
        %v1629 = vsub.f32 1.0, %v1235
        %v1630 = vmul.f32 %v1629, %v1628
        %v1631 = vmul.f32 %v1235, %v539
        %v1632 = vadd.f32 %v1630, %v1631
        %1633 = vst [vmem:[#allocation10] sm:$0xff] %v1632
        %v1634 = vpack.c.bf16 %v1632, %v1632
        %v1635 = vld [vmem:[%s10] sm:$0xf]
        %v1636 = vld [vmem:[%s10 + $0x4] sm:$0xf]
        %v1637 = vld [vmem:[%s10 + $0x8] sm:$0xf]
        %v1638 = vld [vmem:[%s10 + $0xc] sm:$0xf]
        %v1639 = vld [vmem:[%s10 + $0x10] sm:$0xf]
        %v1640 = vld [vmem:[%s10 + $0x14] sm:$0xf]
        %v1641 = vld [vmem:[%s10 + $0x18] sm:$0xf]
        %v1642 = vld [vmem:[%s10 + $0x1c] sm:$0xf]
        %v1643 = vld [vmem:[%s10 + $0x20] sm:$0xf]
        %v1644 = vld [vmem:[%s10 + $0x24] sm:$0xf]
        %v1645 = vld [vmem:[%s10 + $0x28] sm:$0xf]
        %v1646 = vld [vmem:[%s10 + $0x2c] sm:$0xf]
        %v1647 = vld [vmem:[%s10 + $0x30] sm:$0xf]
        %v1648 = vld [vmem:[%s10 + $0x34] sm:$0xf]
        %v1649 = vld [vmem:[%s10 + $0x38] sm:$0xf]
        %v1650 = vld [vmem:[%s10 + $0x3c] sm:$0xf]
        %v1651 = vld [vmem:[%s11] sm:$0x1]
        %v1653 = vlaneseq
        %v1654 = vshrl.u32 %v1653, 7
        %v1655 = vsub.s32 0, %v1654
        %v1656 = vrot.slane %v1651, %v1655
        %v1674 = vunpack.c.l.b16 %v1635
        %v1675 = vunpack.c.l.b16 %v1636
        %v1676 = vunpack.c.l.b16 %v1637
        %v1677 = vunpack.c.l.b16 %v1638
        %v1678 = vunpack.c.l.b16 %v1639
        %v1679 = vunpack.c.l.b16 %v1640
        %v1680 = vunpack.c.l.b16 %v1641
        %v1681 = vunpack.c.l.b16 %v1642
        %v1682 = vunpack.c.l.b16 %v1643
        %v1683 = vunpack.c.l.b16 %v1644
        %v1684 = vunpack.c.l.b16 %v1645
        %v1685 = vunpack.c.l.b16 %v1646
        %v1686 = vunpack.c.l.b16 %v1647
        %v1687 = vunpack.c.l.b16 %v1648
        %v1688 = vunpack.c.l.b16 %v1649
        %v1689 = vunpack.c.l.b16 %v1650
        %v1690 = vpack.c.b16 %v1675, %v1674
        %v1691 = vpack.c.b16 %v1677, %v1676
        %v1692 = vpack.c.b16 %v1679, %v1678
        %v1693 = vpack.c.b16 %v1681, %v1680
        %v1694 = vpack.c.b16 %v1683, %v1682
        %v1695 = vpack.c.b16 %v1685, %v1684
        %v1696 = vpack.c.b16 %v1687, %v1686
        %v1697 = vpack.c.b16 %v1689, %v1688
        %1706 = vmatprep.subr.bf16.mxu0 0
        %1707 = vmatpush1.bf16.msra.mxu0 %v1697
        %1708 = vmatprep.subr.bf16.mxu0 0
        %1709 = vmatpush1.bf16.msra.mxu0 %v1696
        %1710 = vmatprep.subr.bf16.mxu0 0
        %1711 = vmatpush1.bf16.msra.mxu0 %v1695
        %1712 = vmatprep.subr.bf16.mxu0 0
        %1713 = vmatpush1.bf16.msra.mxu0 %v1694
        %1714 = vmatprep.subr.bf16.mxu0 0
        %1715 = vmatpush1.bf16.msra.mxu0 %v1693
        %1716 = vmatprep.subr.bf16.mxu0 0
        %1717 = vmatpush1.bf16.msra.mxu0 %v1692
        %1718 = vmatprep.subr.bf16.mxu0 0
        %1719 = vmatpush1.bf16.msra.mxu0 %v1691
        %1720 = vmatprep.subr.bf16.mxu0 0
        %1721 = vmatpush1.bf16.msra.mxu0 %v1690
        %1722 = vmatprep.subr.bf16.mxu0 0
        %1723 = vmatpush2.bf16.msra.mxu0 0
        %1724 = vmatprep.subr.bf16.mxu0 0
        %1725 = vmatpush2.bf16.msra.mxu0 0
        %1726 = vmatprep.subr.bf16.mxu0 0
        %1727 = vmatpush2.bf16.msra.mxu0 0
        %1728 = vmatprep.subr.bf16.mxu0 0
        %1729 = vmatpush2.bf16.msra.mxu0 0
        %1730 = vmatprep.subr.bf16.mxu0 0
        %1731 = vmatpush2.bf16.msra.mxu0 0
        %1732 = vmatprep.subr.bf16.mxu0 0
        %1733 = vmatpush2.bf16.msra.mxu0 0
        %1734 = vmatprep.subr.bf16.mxu0 0
        %1735 = vmatpush2.bf16.msra.mxu0 0
        %1736 = vmatprep.subr.bf16.mxu0 0
        %1737 = vmatpush2.bf16.msra.mxu0 0
        %1738 = vmatprep.mubr.bf16.mxu0 0
        %1739 = vmatmul.mubr.bf16.gmra.mxu0 %v1634
        %v1740 = vpop.f32.mrf.mxu0
        %v1741 = vadd.f32 %v1656, %v1740
        %v1742 = vpop.f32.mrf.mxu0
        %v1743 = vpop.f32.mrf.mxu0
        %v1744 = vpop.f32.mrf.mxu0
        %1745 = vdwg.mxu0
        %v1746 = vmax.f32 %v1741, 0.0
        %v1747 = vpack.c.bf16 %v1746, %v1746
        %v1748 = vld [vmem:[%s12] sm:$0xf]
        %v1749 = vld [vmem:[%s12 + $0x4] sm:$0xf]
        %v1750 = vld [vmem:[%s12 + $0x8] sm:$0xf]
        %v1751 = vld [vmem:[%s12 + $0xc] sm:$0xf]
        %v1752 = vld [vmem:[%s12 + $0x10] sm:$0xf]
        %v1753 = vld [vmem:[%s12 + $0x14] sm:$0xf]
        %v1754 = vld [vmem:[%s12 + $0x18] sm:$0xf]
        %v1755 = vld [vmem:[%s12 + $0x1c] sm:$0xf]
        %v1756 = vld [vmem:[%s13] sm:$0x1]
        %v1758 = vlaneseq
        %v1759 = vshrl.u32 %v1758, 7
        %v1760 = vsub.s32 0, %v1759
        %v1761 = vrot.slane %v1756, %v1760
        %v1771 = vunpack.c.l.b16 %v1748
        %v1772 = vunpack.c.l.b16 %v1749
        %v1773 = vunpack.c.l.b16 %v1750
        %v1774 = vunpack.c.l.b16 %v1751
        %v1775 = vunpack.c.l.b16 %v1752
        %v1776 = vunpack.c.l.b16 %v1753
        %v1777 = vunpack.c.l.b16 %v1754
        %v1778 = vunpack.c.l.b16 %v1755
        %v1779 = vpack.c.b16 %v1772, %v1771
        %v1780 = vpack.c.b16 %v1774, %v1773
        %v1781 = vpack.c.b16 %v1776, %v1775
        %v1782 = vpack.c.b16 %v1778, %v1777
        %vm1787 = vcmask 523264
        %v1789 = vsel %vm1787, %v1747, 0
        %1791 = vmatprep.subr.bf16.mxu0 0
        %1792 = vmatpush1.bf16.msra.mxu0 0
        %1793 = vmatprep.subr.bf16.mxu0 0
        %1794 = vmatpush1.bf16.msra.mxu0 0
        %1795 = vmatprep.subr.bf16.mxu0 0
        %1796 = vmatpush1.bf16.msra.mxu0 0
        %1797 = vmatprep.subr.bf16.mxu0 0
        %1798 = vmatpush1.bf16.msra.mxu0 0
        %1799 = vmatprep.subr.bf16.mxu0 0
        %1800 = vmatpush1.bf16.msra.mxu0 %v1782
        %1801 = vmatprep.subr.bf16.mxu0 0
        %1802 = vmatpush1.bf16.msra.mxu0 %v1781
        %1803 = vmatprep.subr.bf16.mxu0 0
        %1804 = vmatpush1.bf16.msra.mxu0 %v1780
        %1805 = vmatprep.subr.bf16.mxu0 0
        %1806 = vmatpush1.bf16.msra.mxu0 %v1779
        %1807 = vmatprep.subr.bf16.mxu0 0
        %1808 = vmatpush2.bf16.msra.mxu0 0
        %1809 = vmatprep.subr.bf16.mxu0 0
        %1810 = vmatpush2.bf16.msra.mxu0 0
        %1811 = vmatprep.subr.bf16.mxu0 0
        %1812 = vmatpush2.bf16.msra.mxu0 0
        %1813 = vmatprep.subr.bf16.mxu0 0
        %1814 = vmatpush2.bf16.msra.mxu0 0
        %1815 = vmatprep.subr.bf16.mxu0 0
        %1816 = vmatpush2.bf16.msra.mxu0 0
        %1817 = vmatprep.subr.bf16.mxu0 0
        %1818 = vmatpush2.bf16.msra.mxu0 0
        %1819 = vmatprep.subr.bf16.mxu0 0
        %1820 = vmatpush2.bf16.msra.mxu0 0
        %1821 = vmatprep.subr.bf16.mxu0 0
        %1822 = vmatpush2.bf16.msra.mxu0 0
        %1823 = vmatprep.mubr.bf16.mxu0 0
        %1824 = vmatmul.mubr.bf16.gmra.mxu0 %v1789
        %v1825 = vpop.f32.mrf.mxu0
        %v1826 = vadd.f32 %v1761, %v1825
        %v1827 = vpop.f32.mrf.mxu0
        %v1828 = vpop.f32.mrf.mxu0
        %v1829 = vpop.f32.mrf.mxu0
        %1830 = vdwg.mxu0
        %1831 = vst [vmem:[%s524] sm:$0xff] %v1826
        %s1832 = sand.u32 %s340, 1
        %s1833 = scalar_lea.sflag [#allocation5], %s1832
        %s1834 = sand.u32 %s340, 1
        %s1835 = smul.addr %s1834, 8
        %s1836 = scalar_lea.vmem [#allocation9], %s1835
        // Predicated region
        $region93: #{tpu_custom_call.1} parent=75 // pred_check
          %p1837 = pneg %p350
        $region94: #{tpu_custom_call.1} parent=75 // pred_check_branch
          %1839 = sbr.rel (%p1837) target = $region96
        $region95: #{tpu_custom_call.1} parent=75 // pred_region
          %s1841 = ssub.s32 128, 128
          %1842 = vsyncadd %s1833, %s1841
          %s1843 = smul.addr %s33, 128
          %s1844 = scalar_lea.hbm %s14, %s1843
          %s1846 = sshll.u32 %s1836, 4
          %s1847 = int_to_ptr.vmem [resolvable:$true] %s1846
          %1849 = dma.vmem_to_hbm [thread:$0]  %s1847, 128, %s1844, %s1833
        $region96: #{tpu_custom_call.1} parent=75 // pred_fallthru
          _
        // Predicated region
        $region97: #{tpu_custom_call.1} parent=75 // pred_check
          %p1850 = pneg %p371
        $region98: #{tpu_custom_call.1} parent=75 // pred_check_branch
          %1852 = sbr.rel (%p1850) target = $region100
        $region99: #{tpu_custom_call.1} parent=75 // pred_region
          %s1854 = ssub.s32 128, 128
          %1855 = vsyncadd [#allocation11], %s1854
          %s1857 = sshll.u32 [#allocation10], 4
          %s1858 = int_to_ptr.vmem [resolvable:$true] %s1857
          %1860 = dma.vmem_to_hbm [thread:$0]  %s1858, 128, %s15, [#allocation11]
        $region100: #{tpu_custom_call.1} parent=75 // pred_fallthru
          _
        // Predicated region
        $region101: #{tpu_custom_call.1} parent=75 // pred_check
          %p1861 = pneg %p371
        $region102: #{tpu_custom_call.1} parent=75 // pred_check_branch
          %1863 = sbr.rel (%p1861) target = $region104
        $region103: #{tpu_custom_call.1} parent=75 // pred_region
          %1864 = dma.done [#allocation11], 128
        $region104: #{tpu_custom_call.1} parent=75 // pred_fallthru
          _
      $region76: #{tpu_custom_call.1} parent=5 // pred_fallthru
        _
      %p1865 = scmp.le.s32.totalorder 2, %s28
      // Predicated region
      $region105: #{tpu_custom_call.1} parent=5 // pred_check
        %p1866 = pneg %p1865
      $region106: #{tpu_custom_call.1} parent=5 // pred_check_branch
        %1868 = sbr.rel (%p1866) target = $region108
      $region107: #{tpu_custom_call.1} parent=5 // pred_region
        %s1869 = ssub.s32 %s28, 2
        // Predicated region
        $region109: #{tpu_custom_call.1} parent=107 // pred_check
          %p1870 = pneg %p356
        $region110: #{tpu_custom_call.1} parent=107 // pred_check_branch
          %1872 = sbr.rel (%p1870) target = $region112
        $region111: #{tpu_custom_call.1} parent=107 // pred_region
          %s1873 = sand.u32 %s341, 1
          %s1874 = scalar_lea.sflag [#allocation5], %s1873
          %s1875 = sand.u32 %s341, 1
          %s1876 = smul.addr %s1875, 8
          %s1877 = scalar_lea.vmem [#allocation9], %s1876
          %1878 = dma.done %s1874, 128
        $region112: #{tpu_custom_call.1} parent=107 // pred_fallthru
          _
      $region108: #{tpu_custom_call.1} parent=5 // pred_fallthru
        _
    $region6: #{tpu_custom_call.1} parent=1 // loop_footer
      %s32 = sadd.s32 1, %s28
    $region7: #{tpu_custom_call.1} parent=1 // loop_footer_branch
      %27 = sbr.rel target = $region3
    $region8: #{tpu_custom_call.1} parent=1 // loop_exit
      _
    %1879 = vsyncpa [#allocation4], 1
    %s1880 = scalar_lea.sflag [#allocation4], 1
    %1881 = vsyncpa %s1880, 1
    %1882 = vsyncpa [#allocation7], 1
    %1883 = vsyncpa [#allocation5], 1
    %s1884 = scalar_lea.sflag [#allocation5], 1
    %1885 = vsyncpa %s1884, 1
    %1886 = vsyncpa [#allocation11], 1

</llo_original>
